<compile_context>
chip_gen: v7x
topology: tpu7x:2x2x1
jax: 0.10.0
libtpu: 0.0.40
codegen_flags: <defaults>
</compile_context>

<pallas_src>
import functools
import math

import jax
import jax.numpy as jnp
import numpy as np
from jax.experimental import pallas as pl
from jax.experimental.pallas import tpu as pltpu  # noqa: F401  (TPU backend)


HIDDEN = 100   # hidden_size default hard-coded in the PyTorch module
LANE = 128     # TPU vreg lane width


def _ceil_to(n, m):
    return ((n + m - 1) // m) * m


def _lstm_encoder_kernel(x_ref, h0_ref, c0_ref, wih_ref, whh_ref, b_ref,
                         out_ref, hn_ref, cn_ref):
    """Single-invocation LSTM recurrence.

    x_ref   : (T*B, Hp)   f32   embedded tokens, lane-padded to Hp
    h0/c0   : (B, Hp)     f32   initial hidden / cell (padded lanes zero)
    wih/whh : (Hp, 4*Hp)  bf16  W_ih^T / W_hh^T, gate k at lanes [k*Hp, k*Hp+H)
    b_ref   : (1, 4*Hp)   f32   b_ih + b_hh (padded lanes zero)
    out_ref : (T, B, Hp)  f32   per-step hidden states
    hn/cn   : (B, Hp)     f32   final hidden / cell
    """
    T, B, Hp = out_ref.shape

    # (1) Hoisted input projection: one batched (T*B, Hp) x (Hp, 4*Hp) bf16
    #     MXU matmul with f32 accumulation instead of T tiny per-step matmuls.
    gx = jnp.dot(x_ref[...].astype(jnp.bfloat16), wih_ref[...],
                 preferred_element_type=jnp.float32) + b_ref[...]   # (T*B, 4*Hp)

    whh = whh_ref[...]            # (Hp, 4*Hp) bf16, stays resident
    h = h0_ref[...]               # (B, Hp) f32
    c = c0_ref[...]               # (B, Hp) f32

    # (2) Fully unrolled serial recurrence (T small & static) so the LLO
    #     scheduler can interleave MXU / VPU / EUP work across timesteps.
    for t in range(T):
        gates = gx[t * B:(t + 1) * B, :] + jnp.dot(
            h.astype(jnp.bfloat16), whh, preferred_element_type=jnp.float32)
        # (3) 128-lane-aligned gate slices (PyTorch gate order i, f, g, o).
        i = jax.nn.sigmoid(gates[:, 0 * Hp:1 * Hp])
        f = jax.nn.sigmoid(gates[:, 1 * Hp:2 * Hp])
        g = jnp.tanh(gates[:, 2 * Hp:3 * Hp])
        o = jax.nn.sigmoid(gates[:, 3 * Hp:4 * Hp])
        c = f * c + i * g
        h = o * jnp.tanh(c)
        out_ref[t] = h

    hn_ref[...] = h
    cn_ref[...] = c


def _pack_params(params, hp):
    """Transpose / lane-pad / bf16-cast the raw PyTorch-shaped parameters."""
    emb = params["emb"]                        # (V, H)
    H = emb.shape[1]
    emb_p = jnp.zeros((emb.shape[0], hp), jnp.float32).at[:, :H].set(emb)

    def pad_gates_t(w):                        # (4H, H) -> (hp, 4*hp) == padded W^T
        wp = jnp.zeros((hp, 4 * hp), jnp.float32)
        for k in range(4):
            wp = wp.at[:H, k * hp:k * hp + H].set(w[k * H:(k + 1) * H, :].T)
        return wp.astype(jnp.bfloat16)

    wih_p = pad_gates_t(params["w_ih"])
    whh_p = pad_gates_t(params["w_hh"])

    b = params["b_ih"] + params["b_hh"]        # (4H,)
    b_p = jnp.zeros((1, 4 * hp), jnp.float32)
    for k in range(4):
        b_p = b_p.at[0, k * hp:k * hp + H].set(b[k * H:(k + 1) * H])
    return emb_p, wih_p, whh_p, b_p


def lstm_encoder_forward(token_ids, prev, params):
    """token_ids: (T, B) int32; prev = (h0, c0), each (1, B, H) float32.
    Returns (out, (h_n, c_n)) with out (T, B, H) and h_n/c_n (1, B, H)."""
    h0, c0 = prev
    T, B = token_ids.shape
    H = params["emb"].shape[1]
    Hp = _ceil_to(H, LANE)

    emb_p, wih_p, whh_p, b_p = _pack_params(params, Hp)

    # Embedding lookup is a gather -> XLA glue; lane-padded so the kernel sees
    # a lane-dense (T*B, Hp) slab.
    # TODO(synk): at production T*B, fold the gather into the kernel via
    # scalar-prefetched token ids + a pl.Element row-gather BlockSpec to save
    # one HBM round trip of the (T, B, H) activations.
    x = jnp.take(emb_p, token_ids, axis=0)          # (T, B, Hp) f32
    x2 = x.reshape(T * B, Hp)

    h0_p = jnp.zeros((B, Hp), jnp.float32).at[:, :H].set(h0[0])
    c0_p = jnp.zeros((B, Hp), jnp.float32).at[:, :H].set(c0[0])

    # No grid: all operands (<0.5 MiB total at these shapes) live in VMEM for
    # the whole call via the default whole-array BlockSpecs, eliminating the
    # old per-timestep grid-step overhead entirely.
    out_p, hn_p, cn_p = pl.pallas_call(
        _lstm_encoder_kernel,
        out_shape=(
            jax.ShapeDtypeStruct((T, B, Hp), jnp.float32),   # per-step hidden
            jax.ShapeDtypeStruct((B, Hp), jnp.float32),      # h_n
            jax.ShapeDtypeStruct((B, Hp), jnp.float32),      # c_n
        ),
    )(x2, h0_p, c0_p, wih_p, whh_p, b_p)

    out = out_p[:, :, :H]
    h_n = hn_p[None, :, :H]
    c_n = cn_p[None, :, :H]
    return out, (h_n, c_n)


def init_states(batch_size, hidden=HIDDEN):
    """Mirror of LSTMEncoder.init_states: zero (h0, c0) of shape (1, B, H)."""
    z = jnp.zeros((1, batch_size, hidden), jnp.float32)
    return (z, z)


def init_params(key, vocab_size, hidden=HIDDEN):
    """Raw parameters with the PyTorch module's shapes / init distributions."""
    ks = jax.random.split(key, 5)
    bound = 1.0 / math.sqrt(hidden)
    u = lambda k, shape: jax.random.uniform(k, shape, jnp.float32, -bound, bound)
    return {
        "emb": jax.random.normal(ks[0], (vocab_size, hidden), jnp.float32),
        "w_ih": u(ks[1], (4 * hidden, hidden)),     # PyTorch weight_ih_l0
        "w_hh": u(ks[2], (4 * hidden, hidden)),     # PyTorch weight_hh_l0
        "b_ih": u(ks[3], (4 * hidden,)),
        "b_hh": u(ks[4], (4 * hidden,)),
    }


def _reference_forward(token_ids, prev, params):
    """Pure-JAX reference of the PyTorch forward (gate order i, f, g, o).
    Uses the same bf16 weight / matmul-input rounding as the kernel's MXU path
    so the comparison isolates structural bugs from quantization effects."""
    H = params["emb"].shape[1]
    emb = jnp.take(params["emb"], token_ids, axis=0)           # (T, B, H) f32
    wih_t = params["w_ih"].T.astype(jnp.bfloat16)              # (H, 4H)
    whh_t = params["w_hh"].T.astype(jnp.bfloat16)              # (H, 4H)
    bias = (params["b_ih"] + params["b_hh"])[None, :]          # (1, 4H)
    h0, c0 = prev

    def step(carry, x_t):
        h, c = carry
        gates = (jnp.dot(x_t.astype(jnp.bfloat16), wih_t,
                         preferred_element_type=jnp.float32)
                 + jnp.dot(h.astype(jnp.bfloat16), whh_t,
                           preferred_element_type=jnp.float32)
                 + bias)
        i = jax.nn.sigmoid(gates[:, 0 * H:1 * H])
        f = jax.nn.sigmoid(gates[:, 1 * H:2 * H])
        g = jnp.tanh(gates[:, 2 * H:3 * H])
        o = jax.nn.sigmoid(gates[:, 3 * H:4 * H])
        c = f * c + i * g
        h = o * jnp.tanh(c)
        return (h, c), h

    (h_n, c_n), out = jax.lax.scan(step, (h0[0], c0[0]), emb)  # out: (T, B, H)
    return out, (h_n[None], c_n[None])


if __name__ == "__main__":
    key = jax.random.PRNGKey(0)
    vocab_size = 50
    seq_len, batch, hidden = 8, 2, HIDDEN

    k_params, k_ids, k_h, k_c = jax.random.split(key, 4)
    params = init_params(k_params, vocab_size, hidden)
    token_ids = jax.random.randint(k_ids, (seq_len, batch), 0, vocab_size,
                                   dtype=jnp.int32)
    # The module's init_states() gives zeros; use small non-zero states here to
    # exercise the (hidden, cell) input path of forward().
    h0 = 0.1 * jax.random.normal(k_h, (1, batch, hidden), jnp.float32)
    c0 = 0.1 * jax.random.normal(k_c, (1, batch, hidden), jnp.float32)

    fwd = jax.jit(functools.partial(lstm_encoder_forward, params=params))
    out, (h_n, c_n) = fwd(token_ids, (h0, c0))
    out, h_n, c_n = jax.block_until_ready((out, h_n, c_n))

    ref_out, (ref_h, ref_c) = _reference_forward(token_ids, (h0, c0), params)
    np.testing.assert_allclose(np.asarray(out), np.asarray(ref_out),
                               rtol=1e-3, atol=1e-3)
    np.testing.assert_allclose(np.asarray(h_n), np.asarray(ref_h),
                               rtol=1e-3, atol=1e-3)
    np.testing.assert_allclose(np.asarray(c_n), np.asarray(ref_c),
                               rtol=1e-3, atol=1e-3)
    assert out.shape == (seq_len, batch, hidden)
    assert h_n.shape == (1, batch, hidden) and c_n.shape == (1, batch, hidden)
    print("KERNEL_OK")
</pallas_src>

<mosaic_0001>
module attributes {stable_mosaic.version = 11 : i64} {
  func.func @_lstm_encoder_kernel(%arg0: memref<16x128xf32, #tpu.memory_space<vmem>>, %arg1: memref<2x128xf32, #tpu.memory_space<vmem>>, %arg2: memref<2x128xf32, #tpu.memory_space<vmem>>, %arg3: memref<128x512xbf16, #tpu.memory_space<vmem>>, %arg4: memref<128x512xbf16, #tpu.memory_space<vmem>>, %arg5: memref<1x512xf32, #tpu.memory_space<vmem>>, %arg6: memref<8x2x128xf32, #tpu.memory_space<vmem>>, %arg7: memref<2x128xf32, #tpu.memory_space<vmem>>, %arg8: memref<2x128xf32, #tpu.memory_space<vmem>>) attributes {dimension_semantics = [], scalar_prefetch = 0 : i64, scratch_operands = 0 : i64, tpu.core_type = #tpu.core_type<tc>} {
    %c0 = arith.constant 0 : index
    %c0_0 = arith.constant 0 : index
    %0 = vector.load %arg0[%c0, %c0_0] : memref<16x128xf32, #tpu.memory_space<vmem>>, vector<16x128xf32>
    %1 = arith.truncf %0 : vector<16x128xf32> to vector<16x128xbf16>
    %c0_1 = arith.constant 0 : index
    %c0_2 = arith.constant 0 : index
    %2 = vector.load %arg3[%c0_1, %c0_2] : memref<128x512xbf16, #tpu.memory_space<vmem>>, vector<128x512xbf16>
    %cst = arith.constant dense<0.000000e+00> : vector<16x512xf32>
    %3 = tpu.matmul %1, %2, %cst {dimension_numbers = #tpu.dot_dimension_numbers<[1], [0], [0], [1], [0, 0, 1, 1], [], []>} : vector<16x128xbf16>, vector<128x512xbf16>, vector<16x512xf32> -> vector<16x512xf32>
    %c0_3 = arith.constant 0 : index
    %c0_4 = arith.constant 0 : index
    %4 = vector.load %arg5[%c0_3, %c0_4] : memref<1x512xf32, #tpu.memory_space<vmem>>, vector<1x512xf32>
    %5 = vector.broadcast %4 : vector<1x512xf32> to vector<16x512xf32>
    %6 = arith.addf %3, %5 : vector<16x512xf32>
    %c0_5 = arith.constant 0 : index
    %c0_6 = arith.constant 0 : index
    %7 = vector.load %arg4[%c0_5, %c0_6] : memref<128x512xbf16, #tpu.memory_space<vmem>>, vector<128x512xbf16>
    %c0_7 = arith.constant 0 : index
    %c0_8 = arith.constant 0 : index
    %8 = vector.load %arg1[%c0_7, %c0_8] : memref<2x128xf32, #tpu.memory_space<vmem>>, vector<2x128xf32>
    %c0_9 = arith.constant 0 : index
    %c0_10 = arith.constant 0 : index
    %9 = vector.load %arg2[%c0_9, %c0_10] : memref<2x128xf32, #tpu.memory_space<vmem>>, vector<2x128xf32>
    %10 = vector.extract_strided_slice %6 {offsets = [0, 0], sizes = [2, 512], strides = [1, 1]} : vector<16x512xf32> to vector<2x512xf32>
    %11 = arith.truncf %8 : vector<2x128xf32> to vector<2x128xbf16>
    %cst_11 = arith.constant dense<0.000000e+00> : vector<2x512xf32>
    %12 = tpu.matmul %11, %7, %cst_11 {dimension_numbers = #tpu.dot_dimension_numbers<[1], [0], [0], [1], [0, 0, 1, 1], [], []>} : vector<2x128xbf16>, vector<128x512xbf16>, vector<2x512xf32> -> vector<2x512xf32>
    %13 = arith.addf %10, %12 : vector<2x512xf32>
    %14 = vector.extract_strided_slice %13 {offsets = [0, 0], sizes = [2, 128], strides = [1, 1]} : vector<2x512xf32> to vector<2x128xf32>
    %15 = arith.negf %14 : vector<2x128xf32>
    %16 = math.exp %15 : vector<2x128xf32>
    %cst_12 = arith.constant 1.000000e+00 : f32
    %17 = vector.broadcast %cst_12 : f32 to vector<2x128xf32>
    %18 = arith.addf %17, %16 : vector<2x128xf32>
    %19 = arith.divf %17, %18 : vector<2x128xf32>
    %20 = vector.extract_strided_slice %13 {offsets = [0, 128], sizes = [2, 128], strides = [1, 1]} : vector<2x512xf32> to vector<2x128xf32>
    %21 = arith.negf %20 : vector<2x128xf32>
    %22 = math.exp %21 : vector<2x128xf32>
    %cst_13 = arith.constant 1.000000e+00 : f32
    %23 = vector.broadcast %cst_13 : f32 to vector<2x128xf32>
    %24 = arith.addf %23, %22 : vector<2x128xf32>
    %25 = arith.divf %23, %24 : vector<2x128xf32>
    %26 = vector.extract_strided_slice %13 {offsets = [0, 256], sizes = [2, 128], strides = [1, 1]} : vector<2x512xf32> to vector<2x128xf32>
    %27 = math.tanh %26 : vector<2x128xf32>
    %28 = vector.extract_strided_slice %13 {offsets = [0, 384], sizes = [2, 128], strides = [1, 1]} : vector<2x512xf32> to vector<2x128xf32>
    %29 = arith.negf %28 : vector<2x128xf32>
    %30 = math.exp %29 : vector<2x128xf32>
    %cst_14 = arith.constant 1.000000e+00 : f32
    %31 = vector.broadcast %cst_14 : f32 to vector<2x128xf32>
    %32 = arith.addf %31, %30 : vector<2x128xf32>
    %33 = arith.divf %31, %32 : vector<2x128xf32>
    %34 = arith.mulf %25, %9 : vector<2x128xf32>
    %35 = arith.mulf %19, %27 : vector<2x128xf32>
    %36 = arith.addf %34, %35 : vector<2x128xf32>
    %37 = math.tanh %36 : vector<2x128xf32>
    %38 = arith.mulf %33, %37 : vector<2x128xf32>
    %c0_15 = arith.constant 0 : index
    %c0_16 = arith.constant 0 : index
    %c0_17 = arith.constant 0 : index
    %39 = vector.load %arg6[%c0_15, %c0_16, %c0_17] : memref<8x2x128xf32, #tpu.memory_space<vmem>>, vector<1x2x128xf32>
    %40 = vector.shape_cast %39 : vector<1x2x128xf32> to vector<2x128xf32>
    %41 = vector.shape_cast %38 : vector<2x128xf32> to vector<1x2x128xf32>
    tpu.vector_store %arg6[%c0_15, %c0_16, %c0_17], %41 {strides = array<i32>} : memref<8x2x128xf32, #tpu.memory_space<vmem>>, vector<1x2x128xf32>,
    %42 = vector.extract_strided_slice %6 {offsets = [2, 0], sizes = [2, 512], strides = [1, 1]} : vector<16x512xf32> to vector<2x512xf32>
    %43 = arith.truncf %38 : vector<2x128xf32> to vector<2x128xbf16>
    %cst_18 = arith.constant dense<0.000000e+00> : vector<2x512xf32>
    %44 = tpu.matmul %43, %7, %cst_18 {dimension_numbers = #tpu.dot_dimension_numbers<[1], [0], [0], [1], [0, 0, 1, 1], [], []>} : vector<2x128xbf16>, vector<128x512xbf16>, vector<2x512xf32> -> vector<2x512xf32>
    %45 = arith.addf %42, %44 : vector<2x512xf32>
    %46 = vector.extract_strided_slice %45 {offsets = [0, 0], sizes = [2, 128], strides = [1, 1]} : vector<2x512xf32> to vector<2x128xf32>
    %47 = arith.negf %46 : vector<2x128xf32>
    %48 = math.exp %47 : vector<2x128xf32>
    %cst_19 = arith.constant 1.000000e+00 : f32
    %49 = vector.broadcast %cst_19 : f32 to vector<2x128xf32>
    %50 = arith.addf %49, %48 : vector<2x128xf32>
    %51 = arith.divf %49, %50 : vector<2x128xf32>
    %52 = vector.extract_strided_slice %45 {offsets = [0, 128], sizes = [2, 128], strides = [1, 1]} : vector<2x512xf32> to vector<2x128xf32>
    %53 = arith.negf %52 : vector<2x128xf32>
    %54 = math.exp %53 : vector<2x128xf32>
    %cst_20 = arith.constant 1.000000e+00 : f32
    %55 = vector.broadcast %cst_20 : f32 to vector<2x128xf32>
    %56 = arith.addf %55, %54 : vector<2x128xf32>
    %57 = arith.divf %55, %56 : vector<2x128xf32>
    %58 = vector.extract_strided_slice %45 {offsets = [0, 256], sizes = [2, 128], strides = [1, 1]} : vector<2x512xf32> to vector<2x128xf32>
    %59 = math.tanh %58 : vector<2x128xf32>
    %60 = vector.extract_strided_slice %45 {offsets = [0, 384], sizes = [2, 128], strides = [1, 1]} : vector<2x512xf32> to vector<2x128xf32>
    %61 = arith.negf %60 : vector<2x128xf32>
    %62 = math.exp %61 : vector<2x128xf32>
    %cst_21 = arith.constant 1.000000e+00 : f32
    %63 = vector.broadcast %cst_21 : f32 to vector<2x128xf32>
    %64 = arith.addf %63, %62 : vector<2x128xf32>
    %65 = arith.divf %63, %64 : vector<2x128xf32>
    %66 = arith.mulf %57, %36 : vector<2x128xf32>
    %67 = arith.mulf %51, %59 : vector<2x128xf32>
    %68 = arith.addf %66, %67 : vector<2x128xf32>
    %69 = math.tanh %68 : vector<2x128xf32>
    %70 = arith.mulf %65, %69 : vector<2x128xf32>
    %c1 = arith.constant 1 : index
    %c0_22 = arith.constant 0 : index
    %c0_23 = arith.constant 0 : index
    %71 = vector.load %arg6[%c1, %c0_22, %c0_23] : memref<8x2x128xf32, #tpu.memory_space<vmem>>, vector<1x2x128xf32>
    %72 = vector.shape_cast %71 : vector<1x2x128xf32> to vector<2x128xf32>
    %73 = vector.shape_cast %70 : vector<2x128xf32> to vector<1x2x128xf32>
    tpu.vector_store %arg6[%c1, %c0_22, %c0_23], %73 {strides = array<i32>} : memref<8x2x128xf32, #tpu.memory_space<vmem>>, vector<1x2x128xf32>,
    %74 = vector.extract_strided_slice %6 {offsets = [4, 0], sizes = [2, 512], strides = [1, 1]} : vector<16x512xf32> to vector<2x512xf32>
    %75 = arith.truncf %70 : vector<2x128xf32> to vector<2x128xbf16>
    %cst_24 = arith.constant dense<0.000000e+00> : vector<2x512xf32>
    %76 = tpu.matmul %75, %7, %cst_24 {dimension_numbers = #tpu.dot_dimension_numbers<[1], [0], [0], [1], [0, 0, 1, 1], [], []>} : vector<2x128xbf16>, vector<128x512xbf16>, vector<2x512xf32> -> vector<2x512xf32>
    %77 = arith.addf %74, %76 : vector<2x512xf32>
    %78 = vector.extract_strided_slice %77 {offsets = [0, 0], sizes = [2, 128], strides = [1, 1]} : vector<2x512xf32> to vector<2x128xf32>
    %79 = arith.negf %78 : vector<2x128xf32>
    %80 = math.exp %79 : vector<2x128xf32>
    %cst_25 = arith.constant 1.000000e+00 : f32
    %81 = vector.broadcast %cst_25 : f32 to vector<2x128xf32>
    %82 = arith.addf %81, %80 : vector<2x128xf32>
    %83 = arith.divf %81, %82 : vector<2x128xf32>
    %84 = vector.extract_strided_slice %77 {offsets = [0, 128], sizes = [2, 128], strides = [1, 1]} : vector<2x512xf32> to vector<2x128xf32>
    %85 = arith.negf %84 : vector<2x128xf32>
    %86 = math.exp %85 : vector<2x128xf32>
    %cst_26 = arith.constant 1.000000e+00 : f32
    %87 = vector.broadcast %cst_26 : f32 to vector<2x128xf32>
    %88 = arith.addf %87, %86 : vector<2x128xf32>
    %89 = arith.divf %87, %88 : vector<2x128xf32>
    %90 = vector.extract_strided_slice %77 {offsets = [0, 256], sizes = [2, 128], strides = [1, 1]} : vector<2x512xf32> to vector<2x128xf32>
    %91 = math.tanh %90 : vector<2x128xf32>
    %92 = vector.extract_strided_slice %77 {offsets = [0, 384], sizes = [2, 128], strides = [1, 1]} : vector<2x512xf32> to vector<2x128xf32>
    %93 = arith.negf %92 : vector<2x128xf32>
    %94 = math.exp %93 : vector<2x128xf32>
    %cst_27 = arith.constant 1.000000e+00 : f32
    %95 = vector.broadcast %cst_27 : f32 to vector<2x128xf32>
    %96 = arith.addf %95, %94 : vector<2x128xf32>
    %97 = arith.divf %95, %96 : vector<2x128xf32>
    %98 = arith.mulf %89, %68 : vector<2x128xf32>
    %99 = arith.mulf %83, %91 : vector<2x128xf32>
    %100 = arith.addf %98, %99 : vector<2x128xf32>
    %101 = math.tanh %100 : vector<2x128xf32>
    %102 = arith.mulf %97, %101 : vector<2x128xf32>
    %c2 = arith.constant 2 : index
    %c0_28 = arith.constant 0 : index
    %c0_29 = arith.constant 0 : index
    %103 = vector.load %arg6[%c2, %c0_28, %c0_29] : memref<8x2x128xf32, #tpu.memory_space<vmem>>, vector<1x2x128xf32>
    %104 = vector.shape_cast %103 : vector<1x2x128xf32> to vector<2x128xf32>
    %105 = vector.shape_cast %102 : vector<2x128xf32> to vector<1x2x128xf32>
    tpu.vector_store %arg6[%c2, %c0_28, %c0_29], %105 {strides = array<i32>} : memref<8x2x128xf32, #tpu.memory_space<vmem>>, vector<1x2x128xf32>,
    %106 = vector.extract_strided_slice %6 {offsets = [6, 0], sizes = [2, 512], strides = [1, 1]} : vector<16x512xf32> to vector<2x512xf32>
    %107 = arith.truncf %102 : vector<2x128xf32> to vector<2x128xbf16>
    %cst_30 = arith.constant dense<0.000000e+00> : vector<2x512xf32>
    %108 = tpu.matmul %107, %7, %cst_30 {dimension_numbers = #tpu.dot_dimension_numbers<[1], [0], [0], [1], [0, 0, 1, 1], [], []>} : vector<2x128xbf16>, vector<128x512xbf16>, vector<2x512xf32> -> vector<2x512xf32>
    %109 = arith.addf %106, %108 : vector<2x512xf32>
    %110 = vector.extract_strided_slice %109 {offsets = [0, 0], sizes = [2, 128], strides = [1, 1]} : vector<2x512xf32> to vector<2x128xf32>
    %111 = arith.negf %110 : vector<2x128xf32>
    %112 = math.exp %111 : vector<2x128xf32>
    %cst_31 = arith.constant 1.000000e+00 : f32
    %113 = vector.broadcast %cst_31 : f32 to vector<2x128xf32>
    %114 = arith.addf %113, %112 : vector<2x128xf32>
    %115 = arith.divf %113, %114 : vector<2x128xf32>
    %116 = vector.extract_strided_slice %109 {offsets = [0, 128], sizes = [2, 128], strides = [1, 1]} : vector<2x512xf32> to vector<2x128xf32>
    %117 = arith.negf %116 : vector<2x128xf32>
    %118 = math.exp %117 : vector<2x128xf32>
    %cst_32 = arith.constant 1.000000e+00 : f32
    %119 = vector.broadcast %cst_32 : f32 to vector<2x128xf32>
    %120 = arith.addf %119, %118 : vector<2x128xf32>
    %121 = arith.divf %119, %120 : vector<2x128xf32>
    %122 = vector.extract_strided_slice %109 {offsets = [0, 256], sizes = [2, 128], strides = [1, 1]} : vector<2x512xf32> to vector<2x128xf32>
    %123 = math.tanh %122 : vector<2x128xf32>
    %124 = vector.extract_strided_slice %109 {offsets = [0, 384], sizes = [2, 128], strides = [1, 1]} : vector<2x512xf32> to vector<2x128xf32>
    %125 = arith.negf %124 : vector<2x128xf32>
    %126 = math.exp %125 : vector<2x128xf32>
    %cst_33 = arith.constant 1.000000e+00 : f32
    %127 = vector.broadcast %cst_33 : f32 to vector<2x128xf32>
    %128 = arith.addf %127, %126 : vector<2x128xf32>
    %129 = arith.divf %127, %128 : vector<2x128xf32>
    %130 = arith.mulf %121, %100 : vector<2x128xf32>
    %131 = arith.mulf %115, %123 : vector<2x128xf32>
    %132 = arith.addf %130, %131 : vector<2x128xf32>
    %133 = math.tanh %132 : vector<2x128xf32>
    %134 = arith.mulf %129, %133 : vector<2x128xf32>
    %c3 = arith.constant 3 : index
    %c0_34 = arith.constant 0 : index
    %c0_35 = arith.constant 0 : index
    %135 = vector.load %arg6[%c3, %c0_34, %c0_35] : memref<8x2x128xf32, #tpu.memory_space<vmem>>, vector<1x2x128xf32>
    %136 = vector.shape_cast %135 : vector<1x2x128xf32> to vector<2x128xf32>
    %137 = vector.shape_cast %134 : vector<2x128xf32> to vector<1x2x128xf32>
    tpu.vector_store %arg6[%c3, %c0_34, %c0_35], %137 {strides = array<i32>} : memref<8x2x128xf32, #tpu.memory_space<vmem>>, vector<1x2x128xf32>,
    %138 = vector.extract_strided_slice %6 {offsets = [8, 0], sizes = [2, 512], strides = [1, 1]} : vector<16x512xf32> to vector<2x512xf32>
    %139 = arith.truncf %134 : vector<2x128xf32> to vector<2x128xbf16>
    %cst_36 = arith.constant dense<0.000000e+00> : vector<2x512xf32>
    %140 = tpu.matmul %139, %7, %cst_36 {dimension_numbers = #tpu.dot_dimension_numbers<[1], [0], [0], [1], [0, 0, 1, 1], [], []>} : vector<2x128xbf16>, vector<128x512xbf16>, vector<2x512xf32> -> vector<2x512xf32>
    %141 = arith.addf %138, %140 : vector<2x512xf32>
    %142 = vector.extract_strided_slice %141 {offsets = [0, 0], sizes = [2, 128], strides = [1, 1]} : vector<2x512xf32> to vector<2x128xf32>
    %143 = arith.negf %142 : vector<2x128xf32>
    %144 = math.exp %143 : vector<2x128xf32>
    %cst_37 = arith.constant 1.000000e+00 : f32
    %145 = vector.broadcast %cst_37 : f32 to vector<2x128xf32>
    %146 = arith.addf %145, %144 : vector<2x128xf32>
    %147 = arith.divf %145, %146 : vector<2x128xf32>
    %148 = vector.extract_strided_slice %141 {offsets = [0, 128], sizes = [2, 128], strides = [1, 1]} : vector<2x512xf32> to vector<2x128xf32>
    %149 = arith.negf %148 : vector<2x128xf32>
    %150 = math.exp %149 : vector<2x128xf32>
    %cst_38 = arith.constant 1.000000e+00 : f32
    %151 = vector.broadcast %cst_38 : f32 to vector<2x128xf32>
    %152 = arith.addf %151, %150 : vector<2x128xf32>
    %153 = arith.divf %151, %152 : vector<2x128xf32>
    %154 = vector.extract_strided_slice %141 {offsets = [0, 256], sizes = [2, 128], strides = [1, 1]} : vector<2x512xf32> to vector<2x128xf32>
    %155 = math.tanh %154 : vector<2x128xf32>
    %156 = vector.extract_strided_slice %141 {offsets = [0, 384], sizes = [2, 128], strides = [1, 1]} : vector<2x512xf32> to vector<2x128xf32>
    %157 = arith.negf %156 : vector<2x128xf32>
    %158 = math.exp %157 : vector<2x128xf32>
    %cst_39 = arith.constant 1.000000e+00 : f32
    %159 = vector.broadcast %cst_39 : f32 to vector<2x128xf32>
    %160 = arith.addf %159, %158 : vector<2x128xf32>
    %161 = arith.divf %159, %160 : vector<2x128xf32>
    %162 = arith.mulf %153, %132 : vector<2x128xf32>
    %163 = arith.mulf %147, %155 : vector<2x128xf32>
    %164 = arith.addf %162, %163 : vector<2x128xf32>
    %165 = math.tanh %164 : vector<2x128xf32>
    %166 = arith.mulf %161, %165 : vector<2x128xf32>
    %c4 = arith.constant 4 : index
    %c0_40 = arith.constant 0 : index
    %c0_41 = arith.constant 0 : index
    %167 = vector.load %arg6[%c4, %c0_40, %c0_41] : memref<8x2x128xf32, #tpu.memory_space<vmem>>, vector<1x2x128xf32>
    %168 = vector.shape_cast %167 : vector<1x2x128xf32> to vector<2x128xf32>
    %169 = vector.shape_cast %166 : vector<2x128xf32> to vector<1x2x128xf32>
    tpu.vector_store %arg6[%c4, %c0_40, %c0_41], %169 {strides = array<i32>} : memref<8x2x128xf32, #tpu.memory_space<vmem>>, vector<1x2x128xf32>,
    %170 = vector.extract_strided_slice %6 {offsets = [10, 0], sizes = [2, 512], strides = [1, 1]} : vector<16x512xf32> to vector<2x512xf32>
    %171 = arith.truncf %166 : vector<2x128xf32> to vector<2x128xbf16>
    %cst_42 = arith.constant dense<0.000000e+00> : vector<2x512xf32>
    %172 = tpu.matmul %171, %7, %cst_42 {dimension_numbers = #tpu.dot_dimension_numbers<[1], [0], [0], [1], [0, 0, 1, 1], [], []>} : vector<2x128xbf16>, vector<128x512xbf16>, vector<2x512xf32> -> vector<2x512xf32>
    %173 = arith.addf %170, %172 : vector<2x512xf32>
    %174 = vector.extract_strided_slice %173 {offsets = [0, 0], sizes = [2, 128], strides = [1, 1]} : vector<2x512xf32> to vector<2x128xf32>
    %175 = arith.negf %174 : vector<2x128xf32>
    %176 = math.exp %175 : vector<2x128xf32>
    %cst_43 = arith.constant 1.000000e+00 : f32
    %177 = vector.broadcast %cst_43 : f32 to vector<2x128xf32>
    %178 = arith.addf %177, %176 : vector<2x128xf32>
    %179 = arith.divf %177, %178 : vector<2x128xf32>
    %180 = vector.extract_strided_slice %173 {offsets = [0, 128], sizes = [2, 128], strides = [1, 1]} : vector<2x512xf32> to vector<2x128xf32>
    %181 = arith.negf %180 : vector<2x128xf32>
    %182 = math.exp %181 : vector<2x128xf32>
    %cst_44 = arith.constant 1.000000e+00 : f32
    %183 = vector.broadcast %cst_44 : f32 to vector<2x128xf32>
    %184 = arith.addf %183, %182 : vector<2x128xf32>
    %185 = arith.divf %183, %184 : vector<2x128xf32>
    %186 = vector.extract_strided_slice %173 {offsets = [0, 256], sizes = [2, 128], strides = [1, 1]} : vector<2x512xf32> to vector<2x128xf32>
    %187 = math.tanh %186 : vector<2x128xf32>
    %188 = vector.extract_strided_slice %173 {offsets = [0, 384], sizes = [2, 128], strides = [1, 1]} : vector<2x512xf32> to vector<2x128xf32>
    %189 = arith.negf %188 : vector<2x128xf32>
    %190 = math.exp %189 : vector<2x128xf32>
    %cst_45 = arith.constant 1.000000e+00 : f32
    %191 = vector.broadcast %cst_45 : f32 to vector<2x128xf32>
    %192 = arith.addf %191, %190 : vector<2x128xf32>
    %193 = arith.divf %191, %192 : vector<2x128xf32>
    %194 = arith.mulf %185, %164 : vector<2x128xf32>
    %195 = arith.mulf %179, %187 : vector<2x128xf32>
    %196 = arith.addf %194, %195 : vector<2x128xf32>
    %197 = math.tanh %196 : vector<2x128xf32>
    %198 = arith.mulf %193, %197 : vector<2x128xf32>
    %c5 = arith.constant 5 : index
    %c0_46 = arith.constant 0 : index
    %c0_47 = arith.constant 0 : index
    %199 = vector.load %arg6[%c5, %c0_46, %c0_47] : memref<8x2x128xf32, #tpu.memory_space<vmem>>, vector<1x2x128xf32>
    %200 = vector.shape_cast %199 : vector<1x2x128xf32> to vector<2x128xf32>
    %201 = vector.shape_cast %198 : vector<2x128xf32> to vector<1x2x128xf32>
    tpu.vector_store %arg6[%c5, %c0_46, %c0_47], %201 {strides = array<i32>} : memref<8x2x128xf32, #tpu.memory_space<vmem>>, vector<1x2x128xf32>,
    %202 = vector.extract_strided_slice %6 {offsets = [12, 0], sizes = [2, 512], strides = [1, 1]} : vector<16x512xf32> to vector<2x512xf32>
    %203 = arith.truncf %198 : vector<2x128xf32> to vector<2x128xbf16>
    %cst_48 = arith.constant dense<0.000000e+00> : vector<2x512xf32>
    %204 = tpu.matmul %203, %7, %cst_48 {dimension_numbers = #tpu.dot_dimension_numbers<[1], [0], [0], [1], [0, 0, 1, 1], [], []>} : vector<2x128xbf16>, vector<128x512xbf16>, vector<2x512xf32> -> vector<2x512xf32>
    %205 = arith.addf %202, %204 : vector<2x512xf32>
    %206 = vector.extract_strided_slice %205 {offsets = [0, 0], sizes = [2, 128], strides = [1, 1]} : vector<2x512xf32> to vector<2x128xf32>
    %207 = arith.negf %206 : vector<2x128xf32>
    %208 = math.exp %207 : vector<2x128xf32>
    %cst_49 = arith.constant 1.000000e+00 : f32
    %209 = vector.broadcast %cst_49 : f32 to vector<2x128xf32>
    %210 = arith.addf %209, %208 : vector<2x128xf32>
    %211 = arith.divf %209, %210 : vector<2x128xf32>
    %212 = vector.extract_strided_slice %205 {offsets = [0, 128], sizes = [2, 128], strides = [1, 1]} : vector<2x512xf32> to vector<2x128xf32>
    %213 = arith.negf %212 : vector<2x128xf32>
    %214 = math.exp %213 : vector<2x128xf32>
    %cst_50 = arith.constant 1.000000e+00 : f32
    %215 = vector.broadcast %cst_50 : f32 to vector<2x128xf32>
    %216 = arith.addf %215, %214 : vector<2x128xf32>
    %217 = arith.divf %215, %216 : vector<2x128xf32>
    %218 = vector.extract_strided_slice %205 {offsets = [0, 256], sizes = [2, 128], strides = [1, 1]} : vector<2x512xf32> to vector<2x128xf32>
    %219 = math.tanh %218 : vector<2x128xf32>
    %220 = vector.extract_strided_slice %205 {offsets = [0, 384], sizes = [2, 128], strides = [1, 1]} : vector<2x512xf32> to vector<2x128xf32>
    %221 = arith.negf %220 : vector<2x128xf32>
    %222 = math.exp %221 : vector<2x128xf32>
    %cst_51 = arith.constant 1.000000e+00 : f32
    %223 = vector.broadcast %cst_51 : f32 to vector<2x128xf32>
    %224 = arith.addf %223, %222 : vector<2x128xf32>
    %225 = arith.divf %223, %224 : vector<2x128xf32>
    %226 = arith.mulf %217, %196 : vector<2x128xf32>
    %227 = arith.mulf %211, %219 : vector<2x128xf32>
    %228 = arith.addf %226, %227 : vector<2x128xf32>
    %229 = math.tanh %228 : vector<2x128xf32>
    %230 = arith.mulf %225, %229 : vector<2x128xf32>
    %c6 = arith.constant 6 : index
    %c0_52 = arith.constant 0 : index
    %c0_53 = arith.constant 0 : index
    %231 = vector.load %arg6[%c6, %c0_52, %c0_53] : memref<8x2x128xf32, #tpu.memory_space<vmem>>, vector<1x2x128xf32>
    %232 = vector.shape_cast %231 : vector<1x2x128xf32> to vector<2x128xf32>
    %233 = vector.shape_cast %230 : vector<2x128xf32> to vector<1x2x128xf32>
    tpu.vector_store %arg6[%c6, %c0_52, %c0_53], %233 {strides = array<i32>} : memref<8x2x128xf32, #tpu.memory_space<vmem>>, vector<1x2x128xf32>,
    %234 = vector.extract_strided_slice %6 {offsets = [14, 0], sizes = [2, 512], strides = [1, 1]} : vector<16x512xf32> to vector<2x512xf32>
    %235 = arith.truncf %230 : vector<2x128xf32> to vector<2x128xbf16>
    %cst_54 = arith.constant dense<0.000000e+00> : vector<2x512xf32>
    %236 = tpu.matmul %235, %7, %cst_54 {dimension_numbers = #tpu.dot_dimension_numbers<[1], [0], [0], [1], [0, 0, 1, 1], [], []>} : vector<2x128xbf16>, vector<128x512xbf16>, vector<2x512xf32> -> vector<2x512xf32>
    %237 = arith.addf %234, %236 : vector<2x512xf32>
    %238 = vector.extract_strided_slice %237 {offsets = [0, 0], sizes = [2, 128], strides = [1, 1]} : vector<2x512xf32> to vector<2x128xf32>
    %239 = arith.negf %238 : vector<2x128xf32>
    %240 = math.exp %239 : vector<2x128xf32>
    %cst_55 = arith.constant 1.000000e+00 : f32
    %241 = vector.broadcast %cst_55 : f32 to vector<2x128xf32>
    %242 = arith.addf %241, %240 : vector<2x128xf32>
    %243 = arith.divf %241, %242 : vector<2x128xf32>
    %244 = vector.extract_strided_slice %237 {offsets = [0, 128], sizes = [2, 128], strides = [1, 1]} : vector<2x512xf32> to vector<2x128xf32>
    %245 = arith.negf %244 : vector<2x128xf32>
    %246 = math.exp %245 : vector<2x128xf32>
    %cst_56 = arith.constant 1.000000e+00 : f32
    %247 = vector.broadcast %cst_56 : f32 to vector<2x128xf32>
    %248 = arith.addf %247, %246 : vector<2x128xf32>
    %249 = arith.divf %247, %248 : vector<2x128xf32>
    %250 = vector.extract_strided_slice %237 {offsets = [0, 256], sizes = [2, 128], strides = [1, 1]} : vector<2x512xf32> to vector<2x128xf32>
    %251 = math.tanh %250 : vector<2x128xf32>
    %252 = vector.extract_strided_slice %237 {offsets = [0, 384], sizes = [2, 128], strides = [1, 1]} : vector<2x512xf32> to vector<2x128xf32>
    %253 = arith.negf %252 : vector<2x128xf32>
    %254 = math.exp %253 : vector<2x128xf32>
    %cst_57 = arith.constant 1.000000e+00 : f32
    %255 = vector.broadcast %cst_57 : f32 to vector<2x128xf32>
    %256 = arith.addf %255, %254 : vector<2x128xf32>
    %257 = arith.divf %255, %256 : vector<2x128xf32>
    %258 = arith.mulf %249, %228 : vector<2x128xf32>
    %259 = arith.mulf %243, %251 : vector<2x128xf32>
    %260 = arith.addf %258, %259 : vector<2x128xf32>
    %261 = math.tanh %260 : vector<2x128xf32>
    %262 = arith.mulf %257, %261 : vector<2x128xf32>
    %c7 = arith.constant 7 : index
    %c0_58 = arith.constant 0 : index
    %c0_59 = arith.constant 0 : index
    %263 = vector.load %arg6[%c7, %c0_58, %c0_59] : memref<8x2x128xf32, #tpu.memory_space<vmem>>, vector<1x2x128xf32>
    %264 = vector.shape_cast %263 : vector<1x2x128xf32> to vector<2x128xf32>
    %265 = vector.shape_cast %262 : vector<2x128xf32> to vector<1x2x128xf32>
    tpu.vector_store %arg6[%c7, %c0_58, %c0_59], %265 {strides = array<i32>} : memref<8x2x128xf32, #tpu.memory_space<vmem>>, vector<1x2x128xf32>,
    %c0_60 = arith.constant 0 : index
    %c0_61 = arith.constant 0 : index
    %266 = vector.load %arg7[%c0_60, %c0_61] : memref<2x128xf32, #tpu.memory_space<vmem>>, vector<2x128xf32>
    tpu.vector_store %arg7[%c0_60, %c0_61], %262 {strides = array<i32>} : memref<2x128xf32, #tpu.memory_space<vmem>>, vector<2x128xf32>,
    %c0_62 = arith.constant 0 : index
    %c0_63 = arith.constant 0 : index
    %267 = vector.load %arg8[%c0_62, %c0_63] : memref<2x128xf32, #tpu.memory_space<vmem>>, vector<2x128xf32>
    tpu.vector_store %arg8[%c0_62, %c0_63], %260 {strides = array<i32>} : memref<2x128xf32, #tpu.memory_space<vmem>>, vector<2x128xf32>,
    return
  }
}

</mosaic_0001>

<llo_original>
// kernel: lstm_encoder_forward.1
$region0: #{lstm_encoder_forward.1}
  #allocation0 [shape = 'u32[]', space=smem, size = 0x4, offset = 0x4, fixed_abs, tag = 'smem constant byte address 0x4 - core index']
  #allocation1 [shape = 'u32[144,128]{1,0:T(1,128)}', space=vmem, size = 0x12000, scoped, tag = 'internal scratch']
  %s0 = inlined_call_operand.vmem [shape: f32[16,128], index: 0, kind: input, shape index: {}]
  %s1 = inlined_call_operand.vmem [shape: f32[2,128], index: 1, kind: input, shape index: {}]
  %s2 = inlined_call_operand.vmem [shape: f32[2,128], index: 2, kind: input, shape index: {}]
  %s3 = inlined_call_operand.vmem [shape: bf16[128,512], index: 3, kind: input, shape index: {}]
  %s4 = inlined_call_operand.vmem [shape: bf16[128,512], index: 4, kind: input, shape index: {}]
  %s5 = inlined_call_operand.vmem [shape: f32[1,512], index: 5, kind: input, shape index: {}]
  %s6 = inlined_call_operand.hbm [shape: f32[8,2,128], index: 6, kind: output, shape index: {0}]
  %s7 = inlined_call_operand.vmem [shape: f32[2,128], index: 7, kind: output, shape index: {1}]
  %s8 = inlined_call_operand.vmem [shape: f32[2,128], index: 8, kind: output, shape index: {2}]
  %9 = xla_tuple %s6, %s7, %s8
  %s10 = sld [smem:[#allocation0]]
  $region50: #{lstm_encoder_forward.1} parent=0
    _
  %s12 = ssub.s32 1, %s10
  %s13 = scalar_select 0, %s12, %s10
  $region1: #{lstm_encoder_forward.1} parent=0
    #allocation2 [shape = 'u8[8192]{0}', space=vmem, size = 0x2000, scoped, tag = 'output window, operand 0, single buffered']
    #allocation3 [shape = 's32[1]{0}', space=sflag, size = 0x4, scoped, tag = 'scoped memory for lstm_encoder_forward.1']
    %14 = vsyncpa [#allocation3], 0
    // Predicated region
    $region2: #{lstm_encoder_forward.1} parent=1 // pred_check
      _
    $region3: #{lstm_encoder_forward.1} parent=1 // pred_check_branch
      %16 = sbr.rel (0) target = $region5
    $region4: #{lstm_encoder_forward.1} parent=1 // pred_region
      _
    $region5: #{lstm_encoder_forward.1} parent=1 // pred_fallthru
      _
    // Predicated region
    $region6: #{lstm_encoder_forward.1} parent=1 // pred_check
      _
    $region7: #{lstm_encoder_forward.1} parent=1 // pred_check_branch
      %18 = sbr.rel (0) target = $region9
    $region8: #{lstm_encoder_forward.1} parent=1 // pred_region
      _
    $region9: #{lstm_encoder_forward.1} parent=1 // pred_fallthru
      _
    // Predicated region
    $region10: #{lstm_encoder_forward.1} parent=1 // pred_check
      _
    $region11: #{lstm_encoder_forward.1} parent=1 // pred_check_branch
      %20 = sbr.rel (0) target = $region13
    $region12: #{lstm_encoder_forward.1} parent=1 // pred_region
      _
    $region13: #{lstm_encoder_forward.1} parent=1 // pred_fallthru
      _
    // Predicated region
    $region14: #{lstm_encoder_forward.1} parent=1 // pred_check
      _
    $region15: #{lstm_encoder_forward.1} parent=1 // pred_check_branch
      %22 = sbr.rel (0) target = $region17
    $region16: #{lstm_encoder_forward.1} parent=1 // pred_region
      _
    $region17: #{lstm_encoder_forward.1} parent=1 // pred_fallthru
      _
    // Predicated region
    $region18: #{lstm_encoder_forward.1} parent=1 // pred_check
      _
    $region19: #{lstm_encoder_forward.1} parent=1 // pred_check_branch
      %24 = sbr.rel (0) target = $region21
    $region20: #{lstm_encoder_forward.1} parent=1 // pred_region
      _
    $region21: #{lstm_encoder_forward.1} parent=1 // pred_fallthru
      _
    // Predicated region
    $region22: #{lstm_encoder_forward.1} parent=1 // pred_check
      _
    $region23: #{lstm_encoder_forward.1} parent=1 // pred_check_branch
      %26 = sbr.rel (0) target = $region25
    $region24: #{lstm_encoder_forward.1} parent=1 // pred_region
      _
    $region25: #{lstm_encoder_forward.1} parent=1 // pred_fallthru
      _
    %v28 = vld [vmem:[%s0] sm:$0xff]
    %v29 = vld [vmem:[%s0 + $0x8] sm:$0xff]
    %v30 = vpack.c.bf16 %v29, %v28
    %v31 = vld [vmem:[%s3] sm:$0xff]
    %v32 = vld [vmem:[%s3 + $0x8] sm:$0xff]
    %v33 = vld [vmem:[%s3 + $0x10] sm:$0xff]
    %v34 = vld [vmem:[%s3 + $0x18] sm:$0xff]
    %v35 = vld [vmem:[%s3 + $0x20] sm:$0xff]
    %v36 = vld [vmem:[%s3 + $0x28] sm:$0xff]
    %v37 = vld [vmem:[%s3 + $0x30] sm:$0xff]
    %v38 = vld [vmem:[%s3 + $0x38] sm:$0xff]
    %v39 = vld [vmem:[%s3 + $0x40] sm:$0xff]
    %v40 = vld [vmem:[%s3 + $0x48] sm:$0xff]
    %v41 = vld [vmem:[%s3 + $0x50] sm:$0xff]
    %v42 = vld [vmem:[%s3 + $0x58] sm:$0xff]
    %v43 = vld [vmem:[%s3 + $0x60] sm:$0xff]
    %v44 = vld [vmem:[%s3 + $0x68] sm:$0xff]
    %v45 = vld [vmem:[%s3 + $0x70] sm:$0xff]
    %v46 = vld [vmem:[%s3 + $0x78] sm:$0xff]
    %v47 = vld [vmem:[%s3 + $0x80] sm:$0xff]
    %v48 = vld [vmem:[%s3 + $0x88] sm:$0xff]
    %v49 = vld [vmem:[%s3 + $0x90] sm:$0xff]
    %v50 = vld [vmem:[%s3 + $0x98] sm:$0xff]
    %v51 = vld [vmem:[%s3 + $0xa0] sm:$0xff]
    %v52 = vld [vmem:[%s3 + $0xa8] sm:$0xff]
    %v53 = vld [vmem:[%s3 + $0xb0] sm:$0xff]
    %v54 = vld [vmem:[%s3 + $0xb8] sm:$0xff]
    %v55 = vld [vmem:[%s3 + $0xc0] sm:$0xff]
    %v56 = vld [vmem:[%s3 + $0xc8] sm:$0xff]
    %v57 = vld [vmem:[%s3 + $0xd0] sm:$0xff]
    %v58 = vld [vmem:[%s3 + $0xd8] sm:$0xff]
    %v59 = vld [vmem:[%s3 + $0xe0] sm:$0xff]
    %v60 = vld [vmem:[%s3 + $0xe8] sm:$0xff]
    %v61 = vld [vmem:[%s3 + $0xf0] sm:$0xff]
    %v62 = vld [vmem:[%s3 + $0xf8] sm:$0xff]
    %v63 = vld [vmem:[%s5] sm:$0xf]
    %v65 = vlaneseq
    %v66 = vshrl.u32 %v65, 7
    %v67 = vsub.s32 0, %v66
    %v68 = vrot.slane %v63, %v67
    %v69 = vlaneseq
    %v70 = vshrl.u32 %v69, 7
    %v71 = vsub.s32 1, %v70
    %v72 = vrot.slane %v63, %v71
    %v73 = vlaneseq
    %v74 = vshrl.u32 %v73, 7
    %v75 = vsub.s32 2, %v74
    %v76 = vrot.slane %v63, %v75
    %v77 = vlaneseq
    %v78 = vshrl.u32 %v77, 7
    %v79 = vsub.s32 3, %v78
    %v80 = vrot.slane %v63, %v79
    %v117 = vunpack.c.l.b16 %v31
    %v118 = vunpack.c.h.b16 %v31
    %v119 = vunpack.c.l.b16 %v32
    %v120 = vunpack.c.h.b16 %v32
    %v121 = vunpack.c.l.b16 %v33
    %v122 = vunpack.c.h.b16 %v33
    %v123 = vunpack.c.l.b16 %v34
    %v124 = vunpack.c.h.b16 %v34
    %v125 = vunpack.c.l.b16 %v35
    %v126 = vunpack.c.h.b16 %v35
    %v127 = vunpack.c.l.b16 %v36
    %v128 = vunpack.c.h.b16 %v36
    %v129 = vunpack.c.l.b16 %v37
    %v130 = vunpack.c.h.b16 %v37
    %v131 = vunpack.c.l.b16 %v38
    %v132 = vunpack.c.h.b16 %v38
    %v133 = vunpack.c.l.b16 %v39
    %v134 = vunpack.c.h.b16 %v39
    %v135 = vunpack.c.l.b16 %v40
    %v136 = vunpack.c.h.b16 %v40
    %v137 = vunpack.c.l.b16 %v41
    %v138 = vunpack.c.h.b16 %v41
    %v139 = vunpack.c.l.b16 %v42
    %v140 = vunpack.c.h.b16 %v42
    %v141 = vunpack.c.l.b16 %v43
    %v142 = vunpack.c.h.b16 %v43
    %v143 = vunpack.c.l.b16 %v44
    %v144 = vunpack.c.h.b16 %v44
    %v145 = vunpack.c.l.b16 %v45
    %v146 = vunpack.c.h.b16 %v45
    %v147 = vunpack.c.l.b16 %v46
    %v148 = vunpack.c.h.b16 %v46
    %v149 = vunpack.c.l.b16 %v47
    %v150 = vunpack.c.h.b16 %v47
    %v151 = vunpack.c.l.b16 %v48
    %v152 = vunpack.c.h.b16 %v48
    %v153 = vunpack.c.l.b16 %v49
    %v154 = vunpack.c.h.b16 %v49
    %v155 = vunpack.c.l.b16 %v50
    %v156 = vunpack.c.h.b16 %v50
    %v157 = vunpack.c.l.b16 %v51
    %v158 = vunpack.c.h.b16 %v51
    %v159 = vunpack.c.l.b16 %v52
    %v160 = vunpack.c.h.b16 %v52
    %v161 = vunpack.c.l.b16 %v53
    %v162 = vunpack.c.h.b16 %v53
    %v163 = vunpack.c.l.b16 %v54
    %v164 = vunpack.c.h.b16 %v54
    %v165 = vunpack.c.l.b16 %v55
    %v166 = vunpack.c.h.b16 %v55
    %v167 = vunpack.c.l.b16 %v56
    %v168 = vunpack.c.h.b16 %v56
    %v169 = vunpack.c.l.b16 %v57
    %v170 = vunpack.c.h.b16 %v57
    %v171 = vunpack.c.l.b16 %v58
    %v172 = vunpack.c.h.b16 %v58
    %v173 = vunpack.c.l.b16 %v59
    %v174 = vunpack.c.h.b16 %v59
    %v175 = vunpack.c.l.b16 %v60
    %v176 = vunpack.c.h.b16 %v60
    %v177 = vunpack.c.l.b16 %v61
    %v178 = vunpack.c.h.b16 %v61
    %v179 = vunpack.c.l.b16 %v62
    %v180 = vunpack.c.h.b16 %v62
    %v181 = vpack.c.b16 %v121, %v117
    %v182 = vpack.c.b16 %v122, %v118
    %v183 = vpack.c.b16 %v123, %v119
    %v184 = vpack.c.b16 %v124, %v120
    %v185 = vpack.c.b16 %v129, %v125
    %v186 = vpack.c.b16 %v130, %v126
    %v187 = vpack.c.b16 %v131, %v127
    %v188 = vpack.c.b16 %v132, %v128
    %v189 = vpack.c.b16 %v137, %v133
    %v190 = vpack.c.b16 %v138, %v134
    %v191 = vpack.c.b16 %v139, %v135
    %v192 = vpack.c.b16 %v140, %v136
    %v193 = vpack.c.b16 %v145, %v141
    %v194 = vpack.c.b16 %v146, %v142
    %v195 = vpack.c.b16 %v147, %v143
    %v196 = vpack.c.b16 %v148, %v144
    %v197 = vpack.c.b16 %v153, %v149
    %v198 = vpack.c.b16 %v154, %v150
    %v199 = vpack.c.b16 %v155, %v151
    %v200 = vpack.c.b16 %v156, %v152
    %v201 = vpack.c.b16 %v161, %v157
    %v202 = vpack.c.b16 %v162, %v158
    %v203 = vpack.c.b16 %v163, %v159
    %v204 = vpack.c.b16 %v164, %v160
    %v205 = vpack.c.b16 %v169, %v165
    %v206 = vpack.c.b16 %v170, %v166
    %v207 = vpack.c.b16 %v171, %v167
    %v208 = vpack.c.b16 %v172, %v168
    %v209 = vpack.c.b16 %v177, %v173
    %v210 = vpack.c.b16 %v178, %v174
    %v211 = vpack.c.b16 %v179, %v175
    %v212 = vpack.c.b16 %v180, %v176
    %245 = vmatprep.subr.bf16.mxu0 %v182
    %246 = vmatpush1.bf16.msra.mxu0 %v181
    %247 = vmatprep.subr.bf16.mxu0 %v186
    %248 = vmatpush1.bf16.msra.mxu0 %v185
    %249 = vmatprep.subr.bf16.mxu0 %v190
    %250 = vmatpush1.bf16.msra.mxu0 %v189
    %251 = vmatprep.subr.bf16.mxu0 %v194
    %252 = vmatpush1.bf16.msra.mxu0 %v193
    %253 = vmatprep.subr.bf16.mxu0 %v198
    %254 = vmatpush1.bf16.msra.mxu0 %v197
    %255 = vmatprep.subr.bf16.mxu0 %v202
    %256 = vmatpush1.bf16.msra.mxu0 %v201
    %257 = vmatprep.subr.bf16.mxu0 %v206
    %258 = vmatpush1.bf16.msra.mxu0 %v205
    %259 = vmatprep.subr.bf16.mxu0 %v210
    %260 = vmatpush1.bf16.msra.mxu0 %v209
    %261 = vmatprep.subr.bf16.mxu0 0
    %262 = vmatpush1.bf16.msra.mxu0 0
    %263 = vmatprep.subr.bf16.mxu0 0
    %264 = vmatpush1.bf16.msra.mxu0 0
    %265 = vmatprep.subr.bf16.mxu0 0
    %266 = vmatpush1.bf16.msra.mxu0 0
    %267 = vmatprep.subr.bf16.mxu0 0
    %268 = vmatpush1.bf16.msra.mxu0 0
    %269 = vmatprep.subr.bf16.mxu0 0
    %270 = vmatpush1.bf16.msra.mxu0 0
    %271 = vmatprep.subr.bf16.mxu0 0
    %272 = vmatpush1.bf16.msra.mxu0 0
    %273 = vmatprep.subr.bf16.mxu0 0
    %274 = vmatpush1.bf16.msra.mxu0 0
    %275 = vmatprep.subr.bf16.mxu0 0
    %276 = vmatpush1.bf16.msra.mxu0 0
    %277 = vmatprep.mubr.bf16.mxu0 0
    %278 = vmatmul.mubr.bf16.gmra.mrb[0].mxu0 %v30
    %v279 = vpop.f32.mrb[0].mxu0
    %v280 = vadd.f32 %v68, %v279
    %v281 = vpop.f32.mrb[0].mxu0
    %v282 = vadd.f32 %v72, %v281
    %v283 = vpop.f32.mrb[0].mxu0
    %v284 = vadd.f32 %v68, %v283
    %v285 = vpop.f32.mrb[0].mxu0
    %v286 = vadd.f32 %v72, %v285
    %287 = vdwg.mxu0
    %288 = vmatprep.subr.bf16.mxu0 %v184
    %289 = vmatpush1.bf16.msra.mxu0 %v183
    %290 = vmatprep.subr.bf16.mxu0 %v188
    %291 = vmatpush1.bf16.msra.mxu0 %v187
    %292 = vmatprep.subr.bf16.mxu0 %v192
    %293 = vmatpush1.bf16.msra.mxu0 %v191
    %294 = vmatprep.subr.bf16.mxu0 %v196
    %295 = vmatpush1.bf16.msra.mxu0 %v195
    %296 = vmatprep.subr.bf16.mxu0 %v200
    %297 = vmatpush1.bf16.msra.mxu0 %v199
    %298 = vmatprep.subr.bf16.mxu0 %v204
    %299 = vmatpush1.bf16.msra.mxu0 %v203
    %300 = vmatprep.subr.bf16.mxu0 %v208
    %301 = vmatpush1.bf16.msra.mxu0 %v207
    %302 = vmatprep.subr.bf16.mxu0 %v212
    %303 = vmatpush1.bf16.msra.mxu0 %v211
    %304 = vmatprep.subr.bf16.mxu0 0
    %305 = vmatpush1.bf16.msra.mxu0 0
    %306 = vmatprep.subr.bf16.mxu0 0
    %307 = vmatpush1.bf16.msra.mxu0 0
    %308 = vmatprep.subr.bf16.mxu0 0
    %309 = vmatpush1.bf16.msra.mxu0 0
    %310 = vmatprep.subr.bf16.mxu0 0
    %311 = vmatpush1.bf16.msra.mxu0 0
    %312 = vmatprep.subr.bf16.mxu0 0
    %313 = vmatpush1.bf16.msra.mxu0 0
    %314 = vmatprep.subr.bf16.mxu0 0
    %315 = vmatpush1.bf16.msra.mxu0 0
    %316 = vmatprep.subr.bf16.mxu0 0
    %317 = vmatpush1.bf16.msra.mxu0 0
    %318 = vmatprep.subr.bf16.mxu0 0
    %319 = vmatpush1.bf16.msra.mxu0 0
    %320 = vmatprep.mubr.bf16.mxu0 0
    %321 = vmatmul.mubr.bf16.gmra.mrb[0].mxu0 %v30
    %v322 = vpop.f32.mrb[0].mxu0
    %v323 = vadd.f32 %v76, %v322
    %v324 = vpop.f32.mrb[0].mxu0
    %v325 = vadd.f32 %v80, %v324
    %v326 = vpop.f32.mrb[0].mxu0
    %v327 = vadd.f32 %v76, %v326
    %v328 = vpop.f32.mrb[0].mxu0
    %v329 = vadd.f32 %v80, %v328
    %330 = vdwg.mxu0
    %v331 = vld [vmem:[%s4] sm:$0xff]
    %v332 = vld [vmem:[%s4 + $0x8] sm:$0xff]
    %v333 = vld [vmem:[%s4 + $0x10] sm:$0xff]
    %v334 = vld [vmem:[%s4 + $0x18] sm:$0xff]
    %v335 = vld [vmem:[%s4 + $0x20] sm:$0xff]
    %v336 = vld [vmem:[%s4 + $0x28] sm:$0xff]
    %v337 = vld [vmem:[%s4 + $0x30] sm:$0xff]
    %v338 = vld [vmem:[%s4 + $0x38] sm:$0xff]
    %v339 = vld [vmem:[%s4 + $0x40] sm:$0xff]
    %v340 = vld [vmem:[%s4 + $0x48] sm:$0xff]
    %v341 = vld [vmem:[%s4 + $0x50] sm:$0xff]
    %v342 = vld [vmem:[%s4 + $0x58] sm:$0xff]
    %v343 = vld [vmem:[%s4 + $0x60] sm:$0xff]
    %v344 = vld [vmem:[%s4 + $0x68] sm:$0xff]
    %v345 = vld [vmem:[%s4 + $0x70] sm:$0xff]
    %v346 = vld [vmem:[%s4 + $0x78] sm:$0xff]
    %v347 = vld [vmem:[%s4 + $0x80] sm:$0xff]
    %v348 = vld [vmem:[%s4 + $0x88] sm:$0xff]
    %v349 = vld [vmem:[%s4 + $0x90] sm:$0xff]
    %v350 = vld [vmem:[%s4 + $0x98] sm:$0xff]
    %v351 = vld [vmem:[%s4 + $0xa0] sm:$0xff]
    %v352 = vld [vmem:[%s4 + $0xa8] sm:$0xff]
    %v353 = vld [vmem:[%s4 + $0xb0] sm:$0xff]
    %v354 = vld [vmem:[%s4 + $0xb8] sm:$0xff]
    %v355 = vld [vmem:[%s4 + $0xc0] sm:$0xff]
    %v356 = vld [vmem:[%s4 + $0xc8] sm:$0xff]
    %v357 = vld [vmem:[%s4 + $0xd0] sm:$0xff]
    %v358 = vld [vmem:[%s4 + $0xd8] sm:$0xff]
    %v359 = vld [vmem:[%s4 + $0xe0] sm:$0xff]
    %v360 = vld [vmem:[%s4 + $0xe8] sm:$0xff]
    %v361 = vld [vmem:[%s4 + $0xf0] sm:$0xff]
    %v362 = vld [vmem:[%s4 + $0xf8] sm:$0xff]
    %v363 = vld [vmem:[%s1] sm:$0x3]
    %v364 = vld [vmem:[%s2] sm:$0x3]
    %v365 = vpack.c.bf16 %v363, %v363
    %v398 = vunpack.c.l.b16 %v331
    %v399 = vunpack.c.h.b16 %v331
    %v400 = vunpack.c.l.b16 %v332
    %v401 = vunpack.c.h.b16 %v332
    %v402 = vunpack.c.l.b16 %v333
    %v403 = vunpack.c.h.b16 %v333
    %v404 = vunpack.c.l.b16 %v334
    %v405 = vunpack.c.h.b16 %v334
    %v406 = vunpack.c.l.b16 %v335
    %v407 = vunpack.c.h.b16 %v335
    %v408 = vunpack.c.l.b16 %v336
    %v409 = vunpack.c.h.b16 %v336
    %v410 = vunpack.c.l.b16 %v337
    %v411 = vunpack.c.h.b16 %v337
    %v412 = vunpack.c.l.b16 %v338
    %v413 = vunpack.c.h.b16 %v338
    %v414 = vunpack.c.l.b16 %v339
    %v415 = vunpack.c.h.b16 %v339
    %v416 = vunpack.c.l.b16 %v340
    %v417 = vunpack.c.h.b16 %v340
    %v418 = vunpack.c.l.b16 %v341
    %v419 = vunpack.c.h.b16 %v341
    %v420 = vunpack.c.l.b16 %v342
    %v421 = vunpack.c.h.b16 %v342
    %v422 = vunpack.c.l.b16 %v343
    %v423 = vunpack.c.h.b16 %v343
    %v424 = vunpack.c.l.b16 %v344
    %v425 = vunpack.c.h.b16 %v344
    %v426 = vunpack.c.l.b16 %v345
    %v427 = vunpack.c.h.b16 %v345
    %v428 = vunpack.c.l.b16 %v346
    %v429 = vunpack.c.h.b16 %v346
    %v430 = vunpack.c.l.b16 %v347
    %v431 = vunpack.c.h.b16 %v347
    %v432 = vunpack.c.l.b16 %v348
    %v433 = vunpack.c.h.b16 %v348
    %v434 = vunpack.c.l.b16 %v349
    %v435 = vunpack.c.h.b16 %v349
    %v436 = vunpack.c.l.b16 %v350
    %v437 = vunpack.c.h.b16 %v350
    %v438 = vunpack.c.l.b16 %v351
    %v439 = vunpack.c.h.b16 %v351
    %v440 = vunpack.c.l.b16 %v352
    %v441 = vunpack.c.h.b16 %v352
    %v442 = vunpack.c.l.b16 %v353
    %v443 = vunpack.c.h.b16 %v353
    %v444 = vunpack.c.l.b16 %v354
    %v445 = vunpack.c.h.b16 %v354
    %v446 = vunpack.c.l.b16 %v355
    %v447 = vunpack.c.h.b16 %v355
    %v448 = vunpack.c.l.b16 %v356
    %v449 = vunpack.c.h.b16 %v356
    %v450 = vunpack.c.l.b16 %v357
    %v451 = vunpack.c.h.b16 %v357
    %v452 = vunpack.c.l.b16 %v358
    %v453 = vunpack.c.h.b16 %v358
    %v454 = vunpack.c.l.b16 %v359
    %v455 = vunpack.c.h.b16 %v359
    %v456 = vunpack.c.l.b16 %v360
    %v457 = vunpack.c.h.b16 %v360
    %v458 = vunpack.c.l.b16 %v361
    %v459 = vunpack.c.h.b16 %v361
    %v460 = vunpack.c.l.b16 %v362
    %v461 = vunpack.c.h.b16 %v362
    %v462 = vpack.c.b16 %v402, %v398
    %v463 = vpack.c.b16 %v403, %v399
    %v464 = vpack.c.b16 %v404, %v400
    %v465 = vpack.c.b16 %v405, %v401
    %v466 = vpack.c.b16 %v410, %v406
    %v467 = vpack.c.b16 %v411, %v407
    %v468 = vpack.c.b16 %v412, %v408
    %v469 = vpack.c.b16 %v413, %v409
    %v470 = vpack.c.b16 %v418, %v414
    %v471 = vpack.c.b16 %v419, %v415
    %v472 = vpack.c.b16 %v420, %v416
    %v473 = vpack.c.b16 %v421, %v417
    %v474 = vpack.c.b16 %v426, %v422
    %v475 = vpack.c.b16 %v427, %v423
    %v476 = vpack.c.b16 %v428, %v424
    %v477 = vpack.c.b16 %v429, %v425
    %v478 = vpack.c.b16 %v434, %v430
    %v479 = vpack.c.b16 %v435, %v431
    %v480 = vpack.c.b16 %v436, %v432
    %v481 = vpack.c.b16 %v437, %v433
    %v482 = vpack.c.b16 %v442, %v438
    %v483 = vpack.c.b16 %v443, %v439
    %v484 = vpack.c.b16 %v444, %v440
    %v485 = vpack.c.b16 %v445, %v441
    %v486 = vpack.c.b16 %v450, %v446
    %v487 = vpack.c.b16 %v451, %v447
    %v488 = vpack.c.b16 %v452, %v448
    %v489 = vpack.c.b16 %v453, %v449
    %v490 = vpack.c.b16 %v458, %v454
    %v491 = vpack.c.b16 %v459, %v455
    %v492 = vpack.c.b16 %v460, %v456
    %v493 = vpack.c.b16 %v461, %v457
    %526 = vmatprep.subr.bf16.mxu0 %v463
    %527 = vmatpush1.bf16.msra.mxu0 %v462
    %528 = vmatprep.subr.bf16.mxu0 %v467
    %529 = vmatpush1.bf16.msra.mxu0 %v466
    %530 = vmatprep.subr.bf16.mxu0 %v471
    %531 = vmatpush1.bf16.msra.mxu0 %v470
    %532 = vmatprep.subr.bf16.mxu0 %v475
    %533 = vmatpush1.bf16.msra.mxu0 %v474
    %534 = vmatprep.subr.bf16.mxu0 %v479
    %535 = vmatpush1.bf16.msra.mxu0 %v478
    %536 = vmatprep.subr.bf16.mxu0 %v483
    %537 = vmatpush1.bf16.msra.mxu0 %v482
    %538 = vmatprep.subr.bf16.mxu0 %v487
    %539 = vmatpush1.bf16.msra.mxu0 %v486
    %540 = vmatprep.subr.bf16.mxu0 %v491
    %541 = vmatpush1.bf16.msra.mxu0 %v490
    %542 = vmatprep.subr.bf16.mxu0 0
    %543 = vmatpush1.bf16.msra.mxu0 0
    %544 = vmatprep.subr.bf16.mxu0 0
    %545 = vmatpush1.bf16.msra.mxu0 0
    %546 = vmatprep.subr.bf16.mxu0 0
    %547 = vmatpush1.bf16.msra.mxu0 0
    %548 = vmatprep.subr.bf16.mxu0 0
    %549 = vmatpush1.bf16.msra.mxu0 0
    %550 = vmatprep.subr.bf16.mxu0 0
    %551 = vmatpush1.bf16.msra.mxu0 0
    %552 = vmatprep.subr.bf16.mxu0 0
    %553 = vmatpush1.bf16.msra.mxu0 0
    %554 = vmatprep.subr.bf16.mxu0 0
    %555 = vmatpush1.bf16.msra.mxu0 0
    %556 = vmatprep.subr.bf16.mxu0 0
    %557 = vmatpush1.bf16.msra.mxu0 0
    %558 = vmatprep.mubr.bf16.mxu0 0
    %559 = vmatmul.mubr.bf16.gmra.mrb[0].mxu0 %v365
    %v560 = vpop.f32.mrb[0].mxu0
    %v561 = vadd.f32 0.0, %v560
    %v562 = vpop.f32.mrb[0].mxu0
    %v563 = vadd.f32 0.0, %v562
    %v564 = vpop.f32.mrb[0].mxu0
    %v565 = vpop.f32.mrb[0].mxu0
    %566 = vdwg.mxu0
    %567 = vmatprep.subr.bf16.mxu0 %v465
    %568 = vmatpush1.bf16.msra.mxu0 %v464
    %569 = vmatprep.subr.bf16.mxu0 %v469
    %570 = vmatpush1.bf16.msra.mxu0 %v468
    %571 = vmatprep.subr.bf16.mxu0 %v473
    %572 = vmatpush1.bf16.msra.mxu0 %v472
    %573 = vmatprep.subr.bf16.mxu0 %v477
    %574 = vmatpush1.bf16.msra.mxu0 %v476
    %575 = vmatprep.subr.bf16.mxu0 %v481
    %576 = vmatpush1.bf16.msra.mxu0 %v480
    %577 = vmatprep.subr.bf16.mxu0 %v485
    %578 = vmatpush1.bf16.msra.mxu0 %v484
    %579 = vmatprep.subr.bf16.mxu0 %v489
    %580 = vmatpush1.bf16.msra.mxu0 %v488
    %581 = vmatprep.subr.bf16.mxu0 %v493
    %582 = vmatpush1.bf16.msra.mxu0 %v492
    %583 = vmatprep.subr.bf16.mxu0 0
    %584 = vmatpush1.bf16.msra.mxu0 0
    %585 = vmatprep.subr.bf16.mxu0 0
    %586 = vmatpush1.bf16.msra.mxu0 0
    %587 = vmatprep.subr.bf16.mxu0 0
    %588 = vmatpush1.bf16.msra.mxu0 0
    %589 = vmatprep.subr.bf16.mxu0 0
    %590 = vmatpush1.bf16.msra.mxu0 0
    %591 = vmatprep.subr.bf16.mxu0 0
    %592 = vmatpush1.bf16.msra.mxu0 0
    %593 = vmatprep.subr.bf16.mxu0 0
    %594 = vmatpush1.bf16.msra.mxu0 0
    %595 = vmatprep.subr.bf16.mxu0 0
    %596 = vmatpush1.bf16.msra.mxu0 0
    %597 = vmatprep.subr.bf16.mxu0 0
    %598 = vmatpush1.bf16.msra.mxu0 0
    %599 = vmatprep.mubr.bf16.mxu0 0
    %600 = vmatmul.mubr.bf16.gmra.mrb[0].mxu0 %v365
    %v601 = vpop.f32.mrb[0].mxu0
    %v602 = vadd.f32 0.0, %v601
    %v603 = vpop.f32.mrb[0].mxu0
    %v604 = vadd.f32 0.0, %v603
    %v605 = vpop.f32.mrb[0].mxu0
    %v606 = vpop.f32.mrb[0].mxu0
    %607 = vdwg.mxu0
    %v608 = vadd.f32 %v280, %v561
    %v609 = vadd.f32 %v282, %v563
    %v610 = vadd.f32 %v323, %v602
    %v611 = vadd.f32 %v325, %v604
    %v612 = vxor.u32 %v608, 2147483648
    %v613 = vmul.f32 %v612, 1.442695
    %v614 = vpow.pop %v613
    %v615 = vadd.f32 %v614, 1.0
    %v616 = vrcp.pop %v615
    %v617 = vmul.f32 1.0, %v616
    %v618 = vxor.u32 %v609, 2147483648
    %v619 = vmul.f32 %v618, 1.442695
    %v620 = vpow.pop %v619
    %v621 = vadd.f32 %v620, 1.0
    %v622 = vrcp.pop %v621
    %v623 = vmul.f32 1.0, %v622
    %v624 = vtanh.pop %v610
    %v625 = vxor.u32 %v611, 2147483648
    %v626 = vmul.f32 %v625, 1.442695
    %v627 = vpow.pop %v626
    %v628 = vadd.f32 %v627, 1.0
    %v629 = vrcp.pop %v628
    %v630 = vmul.f32 1.0, %v629
    %v631 = vmul.f32 %v623, %v364
    %v632 = vmul.f32 %v617, %v624
    %v633 = vadd.f32 %v631, %v632
    %v634 = vtanh.pop %v633
    %v635 = vmul.f32 %v630, %v634
    %636 = vst [vmem:[#allocation2] sm:$0x3] %v635
    %v637 = vpack.c.bf16 %v635, %v635
    %638 = vmatprep.subr.bf16.mxu0 %v463
    %639 = vmatpush1.bf16.msra.mxu0 %v462
    %640 = vmatprep.subr.bf16.mxu0 %v467
    %641 = vmatpush1.bf16.msra.mxu0 %v466
    %642 = vmatprep.subr.bf16.mxu0 %v471
    %643 = vmatpush1.bf16.msra.mxu0 %v470
    %644 = vmatprep.subr.bf16.mxu0 %v475
    %645 = vmatpush1.bf16.msra.mxu0 %v474
    %646 = vmatprep.subr.bf16.mxu0 %v479
    %647 = vmatpush1.bf16.msra.mxu0 %v478
    %648 = vmatprep.subr.bf16.mxu0 %v483
    %649 = vmatpush1.bf16.msra.mxu0 %v482
    %650 = vmatprep.subr.bf16.mxu0 %v487
    %651 = vmatpush1.bf16.msra.mxu0 %v486
    %652 = vmatprep.subr.bf16.mxu0 %v491
    %653 = vmatpush1.bf16.msra.mxu0 %v490
    %654 = vmatprep.subr.bf16.mxu0 0
    %655 = vmatpush1.bf16.msra.mxu0 0
    %656 = vmatprep.subr.bf16.mxu0 0
    %657 = vmatpush1.bf16.msra.mxu0 0
    %658 = vmatprep.subr.bf16.mxu0 0
    %659 = vmatpush1.bf16.msra.mxu0 0
    %660 = vmatprep.subr.bf16.mxu0 0
    %661 = vmatpush1.bf16.msra.mxu0 0
    %662 = vmatprep.subr.bf16.mxu0 0
    %663 = vmatpush1.bf16.msra.mxu0 0
    %664 = vmatprep.subr.bf16.mxu0 0
    %665 = vmatpush1.bf16.msra.mxu0 0
    %666 = vmatprep.subr.bf16.mxu0 0
    %667 = vmatpush1.bf16.msra.mxu0 0
    %668 = vmatprep.subr.bf16.mxu0 0
    %669 = vmatpush1.bf16.msra.mxu0 0
    %670 = vmatprep.mubr.bf16.mxu0 0
    %671 = vmatmul.mubr.bf16.gmra.mrb[0].mxu0 %v637
    %v672 = vpop.f32.mrb[0].mxu0
    %v673 = vadd.f32 0.0, %v672
    %v674 = vpop.f32.mrb[0].mxu0
    %v675 = vadd.f32 0.0, %v674
    %v676 = vpop.f32.mrb[0].mxu0
    %v677 = vpop.f32.mrb[0].mxu0
    %678 = vdwg.mxu0
    %679 = vmatprep.subr.bf16.mxu0 %v465
    %680 = vmatpush1.bf16.msra.mxu0 %v464
    %681 = vmatprep.subr.bf16.mxu0 %v469
    %682 = vmatpush1.bf16.msra.mxu0 %v468
    %683 = vmatprep.subr.bf16.mxu0 %v473
    %684 = vmatpush1.bf16.msra.mxu0 %v472
    %685 = vmatprep.subr.bf16.mxu0 %v477
    %686 = vmatpush1.bf16.msra.mxu0 %v476
    %687 = vmatprep.subr.bf16.mxu0 %v481
    %688 = vmatpush1.bf16.msra.mxu0 %v480
    %689 = vmatprep.subr.bf16.mxu0 %v485
    %690 = vmatpush1.bf16.msra.mxu0 %v484
    %691 = vmatprep.subr.bf16.mxu0 %v489
    %692 = vmatpush1.bf16.msra.mxu0 %v488
    %693 = vmatprep.subr.bf16.mxu0 %v493
    %694 = vmatpush1.bf16.msra.mxu0 %v492
    %695 = vmatprep.subr.bf16.mxu0 0
    %696 = vmatpush1.bf16.msra.mxu0 0
    %697 = vmatprep.subr.bf16.mxu0 0
    %698 = vmatpush1.bf16.msra.mxu0 0
    %699 = vmatprep.subr.bf16.mxu0 0
    %700 = vmatpush1.bf16.msra.mxu0 0
    %701 = vmatprep.subr.bf16.mxu0 0
    %702 = vmatpush1.bf16.msra.mxu0 0
    %703 = vmatprep.subr.bf16.mxu0 0
    %704 = vmatpush1.bf16.msra.mxu0 0
    %705 = vmatprep.subr.bf16.mxu0 0
    %706 = vmatpush1.bf16.msra.mxu0 0
    %707 = vmatprep.subr.bf16.mxu0 0
    %708 = vmatpush1.bf16.msra.mxu0 0
    %709 = vmatprep.subr.bf16.mxu0 0
    %710 = vmatpush1.bf16.msra.mxu0 0
    %711 = vmatprep.mubr.bf16.mxu0 0
    %712 = vmatmul.mubr.bf16.gmra.mrb[0].mxu0 %v637
    %v713 = vpop.f32.mrb[0].mxu0
    %v714 = vadd.f32 0.0, %v713
    %v715 = vpop.f32.mrb[0].mxu0
    %v716 = vadd.f32 0.0, %v715
    %v717 = vpop.f32.mrb[0].mxu0
    %v718 = vpop.f32.mrb[0].mxu0
    %719 = vdwg.mxu0
    %v724 = vrot.slane %v673, 6
    %v725 = vrot.slane %v675, 6
    %v726 = vrot.slane %v714, 6
    %v727 = vrot.slane %v716, 6
    %v732 = vadd.f32 %v280, %v724
    %v733 = vadd.f32 %v282, %v725
    %v734 = vadd.f32 %v323, %v726
    %v735 = vadd.f32 %v325, %v727
    %v736 = vxor.u32 %v732, 2147483648
    %v737 = vmul.f32 %v736, 1.442695
    %v738 = vpow.pop %v737
    %v739 = vadd.f32 %v738, 1.0
    %v740 = vrcp.pop %v739
    %v741 = vmul.f32 1.0, %v740
    %v742 = vxor.u32 %v733, 2147483648
    %v743 = vmul.f32 %v742, 1.442695
    %v744 = vpow.pop %v743
    %v745 = vadd.f32 %v744, 1.0
    %v746 = vrcp.pop %v745
    %v747 = vmul.f32 1.0, %v746
    %v748 = vtanh.pop %v734
    %v749 = vxor.u32 %v735, 2147483648
    %v750 = vmul.f32 %v749, 1.442695
    %v751 = vpow.pop %v750
    %v752 = vadd.f32 %v751, 1.0
    %v753 = vrcp.pop %v752
    %v754 = vmul.f32 1.0, %v753
    %v756 = vrot.slane %v633, 6
    %v758 = vmul.f32 %v747, %v756
    %v759 = vmul.f32 %v741, %v748
    %v760 = vadd.f32 %v758, %v759
    %v761 = vtanh.pop %v760
    %v762 = vmul.f32 %v754, %v761
    %s763 = scalar_lea.vmem [#allocation2], 2
    %764 = vst [vmem:[%s763 - $0x2] sm:$0xc] %v762
    %v765 = vpack.c.bf16 %v762, %v762
    %v767 = vrot.slane %v765, 1
    %769 = vmatprep.subr.bf16.mxu0 %v463
    %770 = vmatpush1.bf16.msra.mxu0 %v462
    %771 = vmatprep.subr.bf16.mxu0 %v467
    %772 = vmatpush1.bf16.msra.mxu0 %v466
    %773 = vmatprep.subr.bf16.mxu0 %v471
    %774 = vmatpush1.bf16.msra.mxu0 %v470
    %775 = vmatprep.subr.bf16.mxu0 %v475
    %776 = vmatpush1.bf16.msra.mxu0 %v474
    %777 = vmatprep.subr.bf16.mxu0 %v479
    %778 = vmatpush1.bf16.msra.mxu0 %v478
    %779 = vmatprep.subr.bf16.mxu0 %v483
    %780 = vmatpush1.bf16.msra.mxu0 %v482
    %781 = vmatprep.subr.bf16.mxu0 %v487
    %782 = vmatpush1.bf16.msra.mxu0 %v486
    %783 = vmatprep.subr.bf16.mxu0 %v491
    %784 = vmatpush1.bf16.msra.mxu0 %v490
    %785 = vmatprep.subr.bf16.mxu0 0
    %786 = vmatpush1.bf16.msra.mxu0 0
    %787 = vmatprep.subr.bf16.mxu0 0
    %788 = vmatpush1.bf16.msra.mxu0 0
    %789 = vmatprep.subr.bf16.mxu0 0
    %790 = vmatpush1.bf16.msra.mxu0 0
    %791 = vmatprep.subr.bf16.mxu0 0
    %792 = vmatpush1.bf16.msra.mxu0 0
    %793 = vmatprep.subr.bf16.mxu0 0
    %794 = vmatpush1.bf16.msra.mxu0 0
    %795 = vmatprep.subr.bf16.mxu0 0
    %796 = vmatpush1.bf16.msra.mxu0 0
    %797 = vmatprep.subr.bf16.mxu0 0
    %798 = vmatpush1.bf16.msra.mxu0 0
    %799 = vmatprep.subr.bf16.mxu0 0
    %800 = vmatpush1.bf16.msra.mxu0 0
    %801 = vmatprep.mubr.bf16.mxu0 0
    %802 = vmatmul.mubr.bf16.gmra.mrb[0].mxu0 %v767
    %v803 = vpop.f32.mrb[0].mxu0
    %v804 = vadd.f32 0.0, %v803
    %v805 = vpop.f32.mrb[0].mxu0
    %v806 = vadd.f32 0.0, %v805
    %v807 = vpop.f32.mrb[0].mxu0
    %v808 = vpop.f32.mrb[0].mxu0
    %809 = vdwg.mxu0
    %810 = vmatprep.subr.bf16.mxu0 %v465
    %811 = vmatpush1.bf16.msra.mxu0 %v464
    %812 = vmatprep.subr.bf16.mxu0 %v469
    %813 = vmatpush1.bf16.msra.mxu0 %v468
    %814 = vmatprep.subr.bf16.mxu0 %v473
    %815 = vmatpush1.bf16.msra.mxu0 %v472
    %816 = vmatprep.subr.bf16.mxu0 %v477
    %817 = vmatpush1.bf16.msra.mxu0 %v476
    %818 = vmatprep.subr.bf16.mxu0 %v481
    %819 = vmatpush1.bf16.msra.mxu0 %v480
    %820 = vmatprep.subr.bf16.mxu0 %v485
    %821 = vmatpush1.bf16.msra.mxu0 %v484
    %822 = vmatprep.subr.bf16.mxu0 %v489
    %823 = vmatpush1.bf16.msra.mxu0 %v488
    %824 = vmatprep.subr.bf16.mxu0 %v493
    %825 = vmatpush1.bf16.msra.mxu0 %v492
    %826 = vmatprep.subr.bf16.mxu0 0
    %827 = vmatpush1.bf16.msra.mxu0 0
    %828 = vmatprep.subr.bf16.mxu0 0
    %829 = vmatpush1.bf16.msra.mxu0 0
    %830 = vmatprep.subr.bf16.mxu0 0
    %831 = vmatpush1.bf16.msra.mxu0 0
    %832 = vmatprep.subr.bf16.mxu0 0
    %833 = vmatpush1.bf16.msra.mxu0 0
    %834 = vmatprep.subr.bf16.mxu0 0
    %835 = vmatpush1.bf16.msra.mxu0 0
    %836 = vmatprep.subr.bf16.mxu0 0
    %837 = vmatpush1.bf16.msra.mxu0 0
    %838 = vmatprep.subr.bf16.mxu0 0
    %839 = vmatpush1.bf16.msra.mxu0 0
    %840 = vmatprep.subr.bf16.mxu0 0
    %841 = vmatpush1.bf16.msra.mxu0 0
    %842 = vmatprep.mubr.bf16.mxu0 0
    %843 = vmatmul.mubr.bf16.gmra.mrb[0].mxu0 %v767
    %v844 = vpop.f32.mrb[0].mxu0
    %v845 = vadd.f32 0.0, %v844
    %v846 = vpop.f32.mrb[0].mxu0
    %v847 = vadd.f32 0.0, %v846
    %v848 = vpop.f32.mrb[0].mxu0
    %v849 = vpop.f32.mrb[0].mxu0
    %850 = vdwg.mxu0
    %v855 = vrot.slane %v804, 4
    %v856 = vrot.slane %v806, 4
    %v857 = vrot.slane %v845, 4
    %v858 = vrot.slane %v847, 4
    %v863 = vadd.f32 %v280, %v855
    %v864 = vadd.f32 %v282, %v856
    %v865 = vadd.f32 %v323, %v857
    %v866 = vadd.f32 %v325, %v858
    %v867 = vxor.u32 %v863, 2147483648
    %v868 = vmul.f32 %v867, 1.442695
    %v869 = vpow.pop %v868
    %v870 = vadd.f32 %v869, 1.0
    %v871 = vrcp.pop %v870
    %v872 = vmul.f32 1.0, %v871
    %v873 = vxor.u32 %v864, 2147483648
    %v874 = vmul.f32 %v873, 1.442695
    %v875 = vpow.pop %v874
    %v876 = vadd.f32 %v875, 1.0
    %v877 = vrcp.pop %v876
    %v878 = vmul.f32 1.0, %v877
    %v879 = vtanh.pop %v865
    %v880 = vxor.u32 %v866, 2147483648
    %v881 = vmul.f32 %v880, 1.442695
    %v882 = vpow.pop %v881
    %v883 = vadd.f32 %v882, 1.0
    %v884 = vrcp.pop %v883
    %v885 = vmul.f32 1.0, %v884
    %v887 = vrot.slane %v760, 6
    %v889 = vmul.f32 %v878, %v887
    %v890 = vmul.f32 %v872, %v879
    %v891 = vadd.f32 %v889, %v890
    %v892 = vtanh.pop %v891
    %v893 = vmul.f32 %v885, %v892
    %s894 = scalar_lea.vmem [#allocation2], 4
    %895 = vst [vmem:[%s894 - $0x4] sm:$0x30] %v893
    %v896 = vpack.c.bf16 %v893, %v893
    %v898 = vrot.slane %v896, 2
    %900 = vmatprep.subr.bf16.mxu0 %v463
    %901 = vmatpush1.bf16.msra.mxu0 %v462
    %902 = vmatprep.subr.bf16.mxu0 %v467
    %903 = vmatpush1.bf16.msra.mxu0 %v466
    %904 = vmatprep.subr.bf16.mxu0 %v471
    %905 = vmatpush1.bf16.msra.mxu0 %v470
    %906 = vmatprep.subr.bf16.mxu0 %v475
    %907 = vmatpush1.bf16.msra.mxu0 %v474
    %908 = vmatprep.subr.bf16.mxu0 %v479
    %909 = vmatpush1.bf16.msra.mxu0 %v478
    %910 = vmatprep.subr.bf16.mxu0 %v483
    %911 = vmatpush1.bf16.msra.mxu0 %v482
    %912 = vmatprep.subr.bf16.mxu0 %v487
    %913 = vmatpush1.bf16.msra.mxu0 %v486
    %914 = vmatprep.subr.bf16.mxu0 %v491
    %915 = vmatpush1.bf16.msra.mxu0 %v490
    %916 = vmatprep.subr.bf16.mxu0 0
    %917 = vmatpush1.bf16.msra.mxu0 0
    %918 = vmatprep.subr.bf16.mxu0 0
    %919 = vmatpush1.bf16.msra.mxu0 0
    %920 = vmatprep.subr.bf16.mxu0 0
    %921 = vmatpush1.bf16.msra.mxu0 0
    %922 = vmatprep.subr.bf16.mxu0 0
    %923 = vmatpush1.bf16.msra.mxu0 0
    %924 = vmatprep.subr.bf16.mxu0 0
    %925 = vmatpush1.bf16.msra.mxu0 0
    %926 = vmatprep.subr.bf16.mxu0 0
    %927 = vmatpush1.bf16.msra.mxu0 0
    %928 = vmatprep.subr.bf16.mxu0 0
    %929 = vmatpush1.bf16.msra.mxu0 0
    %930 = vmatprep.subr.bf16.mxu0 0
    %931 = vmatpush1.bf16.msra.mxu0 0
    %932 = vmatprep.mubr.bf16.mxu0 0
    %933 = vmatmul.mubr.bf16.gmra.mrb[0].mxu0 %v898
    %v934 = vpop.f32.mrb[0].mxu0
    %v935 = vadd.f32 0.0, %v934
    %v936 = vpop.f32.mrb[0].mxu0
    %v937 = vadd.f32 0.0, %v936
    %v938 = vpop.f32.mrb[0].mxu0
    %v939 = vpop.f32.mrb[0].mxu0
    %940 = vdwg.mxu0
    %941 = vmatprep.subr.bf16.mxu0 %v465
    %942 = vmatpush1.bf16.msra.mxu0 %v464
    %943 = vmatprep.subr.bf16.mxu0 %v469
    %944 = vmatpush1.bf16.msra.mxu0 %v468
    %945 = vmatprep.subr.bf16.mxu0 %v473
    %946 = vmatpush1.bf16.msra.mxu0 %v472
    %947 = vmatprep.subr.bf16.mxu0 %v477
    %948 = vmatpush1.bf16.msra.mxu0 %v476
    %949 = vmatprep.subr.bf16.mxu0 %v481
    %950 = vmatpush1.bf16.msra.mxu0 %v480
    %951 = vmatprep.subr.bf16.mxu0 %v485
    %952 = vmatpush1.bf16.msra.mxu0 %v484
    %953 = vmatprep.subr.bf16.mxu0 %v489
    %954 = vmatpush1.bf16.msra.mxu0 %v488
    %955 = vmatprep.subr.bf16.mxu0 %v493
    %956 = vmatpush1.bf16.msra.mxu0 %v492
    %957 = vmatprep.subr.bf16.mxu0 0
    %958 = vmatpush1.bf16.msra.mxu0 0
    %959 = vmatprep.subr.bf16.mxu0 0
    %960 = vmatpush1.bf16.msra.mxu0 0
    %961 = vmatprep.subr.bf16.mxu0 0
    %962 = vmatpush1.bf16.msra.mxu0 0
    %963 = vmatprep.subr.bf16.mxu0 0
    %964 = vmatpush1.bf16.msra.mxu0 0
    %965 = vmatprep.subr.bf16.mxu0 0
    %966 = vmatpush1.bf16.msra.mxu0 0
    %967 = vmatprep.subr.bf16.mxu0 0
    %968 = vmatpush1.bf16.msra.mxu0 0
    %969 = vmatprep.subr.bf16.mxu0 0
    %970 = vmatpush1.bf16.msra.mxu0 0
    %971 = vmatprep.subr.bf16.mxu0 0
    %972 = vmatpush1.bf16.msra.mxu0 0
    %973 = vmatprep.mubr.bf16.mxu0 0
    %974 = vmatmul.mubr.bf16.gmra.mrb[0].mxu0 %v898
    %v975 = vpop.f32.mrb[0].mxu0
    %v976 = vadd.f32 0.0, %v975
    %v977 = vpop.f32.mrb[0].mxu0
    %v978 = vadd.f32 0.0, %v977
    %v979 = vpop.f32.mrb[0].mxu0
    %v980 = vpop.f32.mrb[0].mxu0
    %981 = vdwg.mxu0
    %v986 = vrot.slane %v935, 2
    %v987 = vrot.slane %v937, 2
    %v988 = vrot.slane %v976, 2
    %v989 = vrot.slane %v978, 2
    %v994 = vadd.f32 %v280, %v986
    %v995 = vadd.f32 %v282, %v987
    %v996 = vadd.f32 %v323, %v988
    %v997 = vadd.f32 %v325, %v989
    %v998 = vxor.u32 %v994, 2147483648
    %v999 = vmul.f32 %v998, 1.442695
    %v1000 = vpow.pop %v999
    %v1001 = vadd.f32 %v1000, 1.0
    %v1002 = vrcp.pop %v1001
    %v1003 = vmul.f32 1.0, %v1002
    %v1004 = vxor.u32 %v995, 2147483648
    %v1005 = vmul.f32 %v1004, 1.442695
    %v1006 = vpow.pop %v1005
    %v1007 = vadd.f32 %v1006, 1.0
    %v1008 = vrcp.pop %v1007
    %v1009 = vmul.f32 1.0, %v1008
    %v1010 = vtanh.pop %v996
    %v1011 = vxor.u32 %v997, 2147483648
    %v1012 = vmul.f32 %v1011, 1.442695
    %v1013 = vpow.pop %v1012
    %v1014 = vadd.f32 %v1013, 1.0
    %v1015 = vrcp.pop %v1014
    %v1016 = vmul.f32 1.0, %v1015
    %v1018 = vrot.slane %v891, 6
    %v1020 = vmul.f32 %v1009, %v1018
    %v1021 = vmul.f32 %v1003, %v1010
    %v1022 = vadd.f32 %v1020, %v1021
    %v1023 = vtanh.pop %v1022
    %v1024 = vmul.f32 %v1016, %v1023
    %s1025 = scalar_lea.vmem [#allocation2], 6
    %1026 = vst [vmem:[%s1025 - $0x6] sm:$0xc0] %v1024
    %v1027 = vpack.c.bf16 %v1024, %v1024
    %v1029 = vrot.slane %v1027, 3
    %1031 = vmatprep.subr.bf16.mxu0 %v463
    %1032 = vmatpush1.bf16.msra.mxu0 %v462
    %1033 = vmatprep.subr.bf16.mxu0 %v467
    %1034 = vmatpush1.bf16.msra.mxu0 %v466
    %1035 = vmatprep.subr.bf16.mxu0 %v471
    %1036 = vmatpush1.bf16.msra.mxu0 %v470
    %1037 = vmatprep.subr.bf16.mxu0 %v475
    %1038 = vmatpush1.bf16.msra.mxu0 %v474
    %1039 = vmatprep.subr.bf16.mxu0 %v479
    %1040 = vmatpush1.bf16.msra.mxu0 %v478
    %1041 = vmatprep.subr.bf16.mxu0 %v483
    %1042 = vmatpush1.bf16.msra.mxu0 %v482
    %1043 = vmatprep.subr.bf16.mxu0 %v487
    %1044 = vmatpush1.bf16.msra.mxu0 %v486
    %1045 = vmatprep.subr.bf16.mxu0 %v491
    %1046 = vmatpush1.bf16.msra.mxu0 %v490
    %1047 = vmatprep.subr.bf16.mxu0 0
    %1048 = vmatpush1.bf16.msra.mxu0 0
    %1049 = vmatprep.subr.bf16.mxu0 0
    %1050 = vmatpush1.bf16.msra.mxu0 0
    %1051 = vmatprep.subr.bf16.mxu0 0
    %1052 = vmatpush1.bf16.msra.mxu0 0
    %1053 = vmatprep.subr.bf16.mxu0 0
    %1054 = vmatpush1.bf16.msra.mxu0 0
    %1055 = vmatprep.subr.bf16.mxu0 0
    %1056 = vmatpush1.bf16.msra.mxu0 0
    %1057 = vmatprep.subr.bf16.mxu0 0
    %1058 = vmatpush1.bf16.msra.mxu0 0
    %1059 = vmatprep.subr.bf16.mxu0 0
    %1060 = vmatpush1.bf16.msra.mxu0 0
    %1061 = vmatprep.subr.bf16.mxu0 0
    %1062 = vmatpush1.bf16.msra.mxu0 0
    %1063 = vmatprep.mubr.bf16.mxu0 0
    %1064 = vmatmul.mubr.bf16.gmra.mrb[0].mxu0 %v1029
    %v1065 = vpop.f32.mrb[0].mxu0
    %v1066 = vadd.f32 0.0, %v1065
    %v1067 = vpop.f32.mrb[0].mxu0
    %v1068 = vadd.f32 0.0, %v1067
    %v1069 = vpop.f32.mrb[0].mxu0
    %v1070 = vpop.f32.mrb[0].mxu0
    %1071 = vdwg.mxu0
    %1072 = vmatprep.subr.bf16.mxu0 %v465
    %1073 = vmatpush1.bf16.msra.mxu0 %v464
    %1074 = vmatprep.subr.bf16.mxu0 %v469
    %1075 = vmatpush1.bf16.msra.mxu0 %v468
    %1076 = vmatprep.subr.bf16.mxu0 %v473
    %1077 = vmatpush1.bf16.msra.mxu0 %v472
    %1078 = vmatprep.subr.bf16.mxu0 %v477
    %1079 = vmatpush1.bf16.msra.mxu0 %v476
    %1080 = vmatprep.subr.bf16.mxu0 %v481
    %1081 = vmatpush1.bf16.msra.mxu0 %v480
    %1082 = vmatprep.subr.bf16.mxu0 %v485
    %1083 = vmatpush1.bf16.msra.mxu0 %v484
    %1084 = vmatprep.subr.bf16.mxu0 %v489
    %1085 = vmatpush1.bf16.msra.mxu0 %v488
    %1086 = vmatprep.subr.bf16.mxu0 %v493
    %1087 = vmatpush1.bf16.msra.mxu0 %v492
    %1088 = vmatprep.subr.bf16.mxu0 0
    %1089 = vmatpush1.bf16.msra.mxu0 0
    %1090 = vmatprep.subr.bf16.mxu0 0
    %1091 = vmatpush1.bf16.msra.mxu0 0
    %1092 = vmatprep.subr.bf16.mxu0 0
    %1093 = vmatpush1.bf16.msra.mxu0 0
    %1094 = vmatprep.subr.bf16.mxu0 0
    %1095 = vmatpush1.bf16.msra.mxu0 0
    %1096 = vmatprep.subr.bf16.mxu0 0
    %1097 = vmatpush1.bf16.msra.mxu0 0
    %1098 = vmatprep.subr.bf16.mxu0 0
    %1099 = vmatpush1.bf16.msra.mxu0 0
    %1100 = vmatprep.subr.bf16.mxu0 0
    %1101 = vmatpush1.bf16.msra.mxu0 0
    %1102 = vmatprep.subr.bf16.mxu0 0
    %1103 = vmatpush1.bf16.msra.mxu0 0
    %1104 = vmatprep.mubr.bf16.mxu0 0
    %1105 = vmatmul.mubr.bf16.gmra.mrb[0].mxu0 %v1029
    %v1106 = vpop.f32.mrb[0].mxu0
    %v1107 = vadd.f32 0.0, %v1106
    %v1108 = vpop.f32.mrb[0].mxu0
    %v1109 = vadd.f32 0.0, %v1108
    %v1110 = vpop.f32.mrb[0].mxu0
    %v1111 = vpop.f32.mrb[0].mxu0
    %1112 = vdwg.mxu0
    %v1113 = vadd.f32 %v284, %v1066
    %v1114 = vadd.f32 %v286, %v1068
    %v1115 = vadd.f32 %v327, %v1107
    %v1116 = vadd.f32 %v329, %v1109
    %v1117 = vxor.u32 %v1113, 2147483648
    %v1118 = vmul.f32 %v1117, 1.442695
    %v1119 = vpow.pop %v1118
    %v1120 = vadd.f32 %v1119, 1.0
    %v1121 = vrcp.pop %v1120
    %v1122 = vmul.f32 1.0, %v1121
    %v1123 = vxor.u32 %v1114, 2147483648
    %v1124 = vmul.f32 %v1123, 1.442695
    %v1125 = vpow.pop %v1124
    %v1126 = vadd.f32 %v1125, 1.0
    %v1127 = vrcp.pop %v1126
    %v1128 = vmul.f32 1.0, %v1127
    %v1129 = vtanh.pop %v1115
    %v1130 = vxor.u32 %v1116, 2147483648
    %v1131 = vmul.f32 %v1130, 1.442695
    %v1132 = vpow.pop %v1131
    %v1133 = vadd.f32 %v1132, 1.0
    %v1134 = vrcp.pop %v1133
    %v1135 = vmul.f32 1.0, %v1134
    %v1137 = vrot.slane %v1022, 6
    %v1139 = vmul.f32 %v1128, %v1137
    %v1140 = vmul.f32 %v1122, %v1129
    %v1141 = vadd.f32 %v1139, %v1140
    %v1142 = vtanh.pop %v1141
    %v1143 = vmul.f32 %v1135, %v1142
    %s1144 = scalar_lea.vmem [#allocation2], 8
    %1145 = vst [vmem:[%s1144] sm:$0x3] %v1143
    %v1146 = vpack.c.bf16 %v1143, %v1143
    %1147 = vmatprep.subr.bf16.mxu0 %v463
    %1148 = vmatpush1.bf16.msra.mxu0 %v462
    %1149 = vmatprep.subr.bf16.mxu0 %v467
    %1150 = vmatpush1.bf16.msra.mxu0 %v466
    %1151 = vmatprep.subr.bf16.mxu0 %v471
    %1152 = vmatpush1.bf16.msra.mxu0 %v470
    %1153 = vmatprep.subr.bf16.mxu0 %v475
    %1154 = vmatpush1.bf16.msra.mxu0 %v474
    %1155 = vmatprep.subr.bf16.mxu0 %v479
    %1156 = vmatpush1.bf16.msra.mxu0 %v478
    %1157 = vmatprep.subr.bf16.mxu0 %v483
    %1158 = vmatpush1.bf16.msra.mxu0 %v482
    %1159 = vmatprep.subr.bf16.mxu0 %v487
    %1160 = vmatpush1.bf16.msra.mxu0 %v486
    %1161 = vmatprep.subr.bf16.mxu0 %v491
    %1162 = vmatpush1.bf16.msra.mxu0 %v490
    %1163 = vmatprep.subr.bf16.mxu0 0
    %1164 = vmatpush1.bf16.msra.mxu0 0
    %1165 = vmatprep.subr.bf16.mxu0 0
    %1166 = vmatpush1.bf16.msra.mxu0 0
    %1167 = vmatprep.subr.bf16.mxu0 0
    %1168 = vmatpush1.bf16.msra.mxu0 0
    %1169 = vmatprep.subr.bf16.mxu0 0
    %1170 = vmatpush1.bf16.msra.mxu0 0
    %1171 = vmatprep.subr.bf16.mxu0 0
    %1172 = vmatpush1.bf16.msra.mxu0 0
    %1173 = vmatprep.subr.bf16.mxu0 0
    %1174 = vmatpush1.bf16.msra.mxu0 0
    %1175 = vmatprep.subr.bf16.mxu0 0
    %1176 = vmatpush1.bf16.msra.mxu0 0
    %1177 = vmatprep.subr.bf16.mxu0 0
    %1178 = vmatpush1.bf16.msra.mxu0 0
    %1179 = vmatprep.mubr.bf16.mxu0 0
    %1180 = vmatmul.mubr.bf16.gmra.mrb[0].mxu0 %v1146
    %v1181 = vpop.f32.mrb[0].mxu0
    %v1182 = vadd.f32 0.0, %v1181
    %v1183 = vpop.f32.mrb[0].mxu0
    %v1184 = vadd.f32 0.0, %v1183
    %v1185 = vpop.f32.mrb[0].mxu0
    %v1186 = vpop.f32.mrb[0].mxu0
    %1187 = vdwg.mxu0
    %1188 = vmatprep.subr.bf16.mxu0 %v465
    %1189 = vmatpush1.bf16.msra.mxu0 %v464
    %1190 = vmatprep.subr.bf16.mxu0 %v469
    %1191 = vmatpush1.bf16.msra.mxu0 %v468
    %1192 = vmatprep.subr.bf16.mxu0 %v473
    %1193 = vmatpush1.bf16.msra.mxu0 %v472
    %1194 = vmatprep.subr.bf16.mxu0 %v477
    %1195 = vmatpush1.bf16.msra.mxu0 %v476
    %1196 = vmatprep.subr.bf16.mxu0 %v481
    %1197 = vmatpush1.bf16.msra.mxu0 %v480
    %1198 = vmatprep.subr.bf16.mxu0 %v485
    %1199 = vmatpush1.bf16.msra.mxu0 %v484
    %1200 = vmatprep.subr.bf16.mxu0 %v489
    %1201 = vmatpush1.bf16.msra.mxu0 %v488
    %1202 = vmatprep.subr.bf16.mxu0 %v493
    %1203 = vmatpush1.bf16.msra.mxu0 %v492
    %1204 = vmatprep.subr.bf16.mxu0 0
    %1205 = vmatpush1.bf16.msra.mxu0 0
    %1206 = vmatprep.subr.bf16.mxu0 0
    %1207 = vmatpush1.bf16.msra.mxu0 0
    %1208 = vmatprep.subr.bf16.mxu0 0
    %1209 = vmatpush1.bf16.msra.mxu0 0
    %1210 = vmatprep.subr.bf16.mxu0 0
    %1211 = vmatpush1.bf16.msra.mxu0 0
    %1212 = vmatprep.subr.bf16.mxu0 0
    %1213 = vmatpush1.bf16.msra.mxu0 0
    %1214 = vmatprep.subr.bf16.mxu0 0
    %1215 = vmatpush1.bf16.msra.mxu0 0
    %1216 = vmatprep.subr.bf16.mxu0 0
    %1217 = vmatpush1.bf16.msra.mxu0 0
    %1218 = vmatprep.subr.bf16.mxu0 0
    %1219 = vmatpush1.bf16.msra.mxu0 0
    %1220 = vmatprep.mubr.bf16.mxu0 0
    %1221 = vmatmul.mubr.bf16.gmra.mrb[0].mxu0 %v1146
    %v1222 = vpop.f32.mrb[0].mxu0
    %v1223 = vadd.f32 0.0, %v1222
    %v1224 = vpop.f32.mrb[0].mxu0
    %v1225 = vadd.f32 0.0, %v1224
    %v1226 = vpop.f32.mrb[0].mxu0
    %v1227 = vpop.f32.mrb[0].mxu0
    %1228 = vdwg.mxu0
    %v1233 = vrot.slane %v1182, 6
    %v1234 = vrot.slane %v1184, 6
    %v1235 = vrot.slane %v1223, 6
    %v1236 = vrot.slane %v1225, 6
    %v1241 = vadd.f32 %v284, %v1233
    %v1242 = vadd.f32 %v286, %v1234
    %v1243 = vadd.f32 %v327, %v1235
    %v1244 = vadd.f32 %v329, %v1236
    %v1245 = vxor.u32 %v1241, 2147483648
    %v1246 = vmul.f32 %v1245, 1.442695
    %v1247 = vpow.pop %v1246
    %v1248 = vadd.f32 %v1247, 1.0
    %v1249 = vrcp.pop %v1248
    %v1250 = vmul.f32 1.0, %v1249
    %v1251 = vxor.u32 %v1242, 2147483648
    %v1252 = vmul.f32 %v1251, 1.442695
    %v1253 = vpow.pop %v1252
    %v1254 = vadd.f32 %v1253, 1.0
    %v1255 = vrcp.pop %v1254
    %v1256 = vmul.f32 1.0, %v1255
    %v1257 = vtanh.pop %v1243
    %v1258 = vxor.u32 %v1244, 2147483648
    %v1259 = vmul.f32 %v1258, 1.442695
    %v1260 = vpow.pop %v1259
    %v1261 = vadd.f32 %v1260, 1.0
    %v1262 = vrcp.pop %v1261
    %v1263 = vmul.f32 1.0, %v1262
    %v1265 = vrot.slane %v1141, 6
    %v1267 = vmul.f32 %v1256, %v1265
    %v1268 = vmul.f32 %v1250, %v1257
    %v1269 = vadd.f32 %v1267, %v1268
    %v1270 = vtanh.pop %v1269
    %v1271 = vmul.f32 %v1263, %v1270
    %s1272 = scalar_lea.vmem [#allocation2], 10
    %1273 = vst [vmem:[%s1272 - $0x2] sm:$0xc] %v1271
    %v1274 = vpack.c.bf16 %v1271, %v1271
    %v1276 = vrot.slane %v1274, 1
    %1278 = vmatprep.subr.bf16.mxu0 %v463
    %1279 = vmatpush1.bf16.msra.mxu0 %v462
    %1280 = vmatprep.subr.bf16.mxu0 %v467
    %1281 = vmatpush1.bf16.msra.mxu0 %v466
    %1282 = vmatprep.subr.bf16.mxu0 %v471
    %1283 = vmatpush1.bf16.msra.mxu0 %v470
    %1284 = vmatprep.subr.bf16.mxu0 %v475
    %1285 = vmatpush1.bf16.msra.mxu0 %v474
    %1286 = vmatprep.subr.bf16.mxu0 %v479
    %1287 = vmatpush1.bf16.msra.mxu0 %v478
    %1288 = vmatprep.subr.bf16.mxu0 %v483
    %1289 = vmatpush1.bf16.msra.mxu0 %v482
    %1290 = vmatprep.subr.bf16.mxu0 %v487
    %1291 = vmatpush1.bf16.msra.mxu0 %v486
    %1292 = vmatprep.subr.bf16.mxu0 %v491
    %1293 = vmatpush1.bf16.msra.mxu0 %v490
    %1294 = vmatprep.subr.bf16.mxu0 0
    %1295 = vmatpush1.bf16.msra.mxu0 0
    %1296 = vmatprep.subr.bf16.mxu0 0
    %1297 = vmatpush1.bf16.msra.mxu0 0
    %1298 = vmatprep.subr.bf16.mxu0 0
    %1299 = vmatpush1.bf16.msra.mxu0 0
    %1300 = vmatprep.subr.bf16.mxu0 0
    %1301 = vmatpush1.bf16.msra.mxu0 0
    %1302 = vmatprep.subr.bf16.mxu0 0
    %1303 = vmatpush1.bf16.msra.mxu0 0
    %1304 = vmatprep.subr.bf16.mxu0 0
    %1305 = vmatpush1.bf16.msra.mxu0 0
    %1306 = vmatprep.subr.bf16.mxu0 0
    %1307 = vmatpush1.bf16.msra.mxu0 0
    %1308 = vmatprep.subr.bf16.mxu0 0
    %1309 = vmatpush1.bf16.msra.mxu0 0
    %1310 = vmatprep.mubr.bf16.mxu0 0
    %1311 = vmatmul.mubr.bf16.gmra.mrb[0].mxu0 %v1276
    %v1312 = vpop.f32.mrb[0].mxu0
    %v1313 = vadd.f32 0.0, %v1312
    %v1314 = vpop.f32.mrb[0].mxu0
    %v1315 = vadd.f32 0.0, %v1314
    %v1316 = vpop.f32.mrb[0].mxu0
    %v1317 = vpop.f32.mrb[0].mxu0
    %1318 = vdwg.mxu0
    %1319 = vmatprep.subr.bf16.mxu0 %v465
    %1320 = vmatpush1.bf16.msra.mxu0 %v464
    %1321 = vmatprep.subr.bf16.mxu0 %v469
    %1322 = vmatpush1.bf16.msra.mxu0 %v468
    %1323 = vmatprep.subr.bf16.mxu0 %v473
    %1324 = vmatpush1.bf16.msra.mxu0 %v472
    %1325 = vmatprep.subr.bf16.mxu0 %v477
    %1326 = vmatpush1.bf16.msra.mxu0 %v476
    %1327 = vmatprep.subr.bf16.mxu0 %v481
    %1328 = vmatpush1.bf16.msra.mxu0 %v480
    %1329 = vmatprep.subr.bf16.mxu0 %v485
    %1330 = vmatpush1.bf16.msra.mxu0 %v484
    %1331 = vmatprep.subr.bf16.mxu0 %v489
    %1332 = vmatpush1.bf16.msra.mxu0 %v488
    %1333 = vmatprep.subr.bf16.mxu0 %v493
    %1334 = vmatpush1.bf16.msra.mxu0 %v492
    %1335 = vmatprep.subr.bf16.mxu0 0
    %1336 = vmatpush1.bf16.msra.mxu0 0
    %1337 = vmatprep.subr.bf16.mxu0 0
    %1338 = vmatpush1.bf16.msra.mxu0 0
    %1339 = vmatprep.subr.bf16.mxu0 0
    %1340 = vmatpush1.bf16.msra.mxu0 0
    %1341 = vmatprep.subr.bf16.mxu0 0
    %1342 = vmatpush1.bf16.msra.mxu0 0
    %1343 = vmatprep.subr.bf16.mxu0 0
    %1344 = vmatpush1.bf16.msra.mxu0 0
    %1345 = vmatprep.subr.bf16.mxu0 0
    %1346 = vmatpush1.bf16.msra.mxu0 0
    %1347 = vmatprep.subr.bf16.mxu0 0
    %1348 = vmatpush1.bf16.msra.mxu0 0
    %1349 = vmatprep.subr.bf16.mxu0 0
    %1350 = vmatpush1.bf16.msra.mxu0 0
    %1351 = vmatprep.mubr.bf16.mxu0 0
    %1352 = vmatmul.mubr.bf16.gmra.mrb[0].mxu0 %v1276
    %v1353 = vpop.f32.mrb[0].mxu0
    %v1354 = vadd.f32 0.0, %v1353
    %v1355 = vpop.f32.mrb[0].mxu0
    %v1356 = vadd.f32 0.0, %v1355
    %v1357 = vpop.f32.mrb[0].mxu0
    %v1358 = vpop.f32.mrb[0].mxu0
    %1359 = vdwg.mxu0
    %v1364 = vrot.slane %v1313, 4
    %v1365 = vrot.slane %v1315, 4
    %v1366 = vrot.slane %v1354, 4
    %v1367 = vrot.slane %v1356, 4
    %v1372 = vadd.f32 %v284, %v1364
    %v1373 = vadd.f32 %v286, %v1365
    %v1374 = vadd.f32 %v327, %v1366
    %v1375 = vadd.f32 %v329, %v1367
    %v1376 = vxor.u32 %v1372, 2147483648
    %v1377 = vmul.f32 %v1376, 1.442695
    %v1378 = vpow.pop %v1377
    %v1379 = vadd.f32 %v1378, 1.0
    %v1380 = vrcp.pop %v1379
    %v1381 = vmul.f32 1.0, %v1380
    %v1382 = vxor.u32 %v1373, 2147483648
    %v1383 = vmul.f32 %v1382, 1.442695
    %v1384 = vpow.pop %v1383
    %v1385 = vadd.f32 %v1384, 1.0
    %v1386 = vrcp.pop %v1385
    %v1387 = vmul.f32 1.0, %v1386
    %v1388 = vtanh.pop %v1374
    %v1389 = vxor.u32 %v1375, 2147483648
    %v1390 = vmul.f32 %v1389, 1.442695
    %v1391 = vpow.pop %v1390
    %v1392 = vadd.f32 %v1391, 1.0
    %v1393 = vrcp.pop %v1392
    %v1394 = vmul.f32 1.0, %v1393
    %v1396 = vrot.slane %v1269, 6
    %v1398 = vmul.f32 %v1387, %v1396
    %v1399 = vmul.f32 %v1381, %v1388
    %v1400 = vadd.f32 %v1398, %v1399
    %v1401 = vtanh.pop %v1400
    %v1402 = vmul.f32 %v1394, %v1401
    %s1403 = scalar_lea.vmem [#allocation2], 12
    %1404 = vst [vmem:[%s1403 - $0x4] sm:$0x30] %v1402
    %v1405 = vpack.c.bf16 %v1402, %v1402
    %v1407 = vrot.slane %v1405, 2
    %1409 = vmatprep.subr.bf16.mxu0 %v463
    %1410 = vmatpush1.bf16.msra.mxu0 %v462
    %1411 = vmatprep.subr.bf16.mxu0 %v467
    %1412 = vmatpush1.bf16.msra.mxu0 %v466
    %1413 = vmatprep.subr.bf16.mxu0 %v471
    %1414 = vmatpush1.bf16.msra.mxu0 %v470
    %1415 = vmatprep.subr.bf16.mxu0 %v475
    %1416 = vmatpush1.bf16.msra.mxu0 %v474
    %1417 = vmatprep.subr.bf16.mxu0 %v479
    %1418 = vmatpush1.bf16.msra.mxu0 %v478
    %1419 = vmatprep.subr.bf16.mxu0 %v483
    %1420 = vmatpush1.bf16.msra.mxu0 %v482
    %1421 = vmatprep.subr.bf16.mxu0 %v487
    %1422 = vmatpush1.bf16.msra.mxu0 %v486
    %1423 = vmatprep.subr.bf16.mxu0 %v491
    %1424 = vmatpush1.bf16.msra.mxu0 %v490
    %1425 = vmatprep.subr.bf16.mxu0 0
    %1426 = vmatpush1.bf16.msra.mxu0 0
    %1427 = vmatprep.subr.bf16.mxu0 0
    %1428 = vmatpush1.bf16.msra.mxu0 0
    %1429 = vmatprep.subr.bf16.mxu0 0
    %1430 = vmatpush1.bf16.msra.mxu0 0
    %1431 = vmatprep.subr.bf16.mxu0 0
    %1432 = vmatpush1.bf16.msra.mxu0 0
    %1433 = vmatprep.subr.bf16.mxu0 0
    %1434 = vmatpush1.bf16.msra.mxu0 0
    %1435 = vmatprep.subr.bf16.mxu0 0
    %1436 = vmatpush1.bf16.msra.mxu0 0
    %1437 = vmatprep.subr.bf16.mxu0 0
    %1438 = vmatpush1.bf16.msra.mxu0 0
    %1439 = vmatprep.subr.bf16.mxu0 0
    %1440 = vmatpush1.bf16.msra.mxu0 0
    %1441 = vmatprep.mubr.bf16.mxu0 0
    %1442 = vmatmul.mubr.bf16.gmra.mrb[0].mxu0 %v1407
    %v1443 = vpop.f32.mrb[0].mxu0
    %v1444 = vadd.f32 0.0, %v1443
    %v1445 = vpop.f32.mrb[0].mxu0
    %v1446 = vadd.f32 0.0, %v1445
    %v1447 = vpop.f32.mrb[0].mxu0
    %v1448 = vpop.f32.mrb[0].mxu0
    %1449 = vdwg.mxu0
    %1450 = vmatprep.subr.bf16.mxu0 %v465
    %1451 = vmatpush1.bf16.msra.mxu0 %v464
    %1452 = vmatprep.subr.bf16.mxu0 %v469
    %1453 = vmatpush1.bf16.msra.mxu0 %v468
    %1454 = vmatprep.subr.bf16.mxu0 %v473
    %1455 = vmatpush1.bf16.msra.mxu0 %v472
    %1456 = vmatprep.subr.bf16.mxu0 %v477
    %1457 = vmatpush1.bf16.msra.mxu0 %v476
    %1458 = vmatprep.subr.bf16.mxu0 %v481
    %1459 = vmatpush1.bf16.msra.mxu0 %v480
    %1460 = vmatprep.subr.bf16.mxu0 %v485
    %1461 = vmatpush1.bf16.msra.mxu0 %v484
    %1462 = vmatprep.subr.bf16.mxu0 %v489
    %1463 = vmatpush1.bf16.msra.mxu0 %v488
    %1464 = vmatprep.subr.bf16.mxu0 %v493
    %1465 = vmatpush1.bf16.msra.mxu0 %v492
    %1466 = vmatprep.subr.bf16.mxu0 0
    %1467 = vmatpush1.bf16.msra.mxu0 0
    %1468 = vmatprep.subr.bf16.mxu0 0
    %1469 = vmatpush1.bf16.msra.mxu0 0
    %1470 = vmatprep.subr.bf16.mxu0 0
    %1471 = vmatpush1.bf16.msra.mxu0 0
    %1472 = vmatprep.subr.bf16.mxu0 0
    %1473 = vmatpush1.bf16.msra.mxu0 0
    %1474 = vmatprep.subr.bf16.mxu0 0
    %1475 = vmatpush1.bf16.msra.mxu0 0
    %1476 = vmatprep.subr.bf16.mxu0 0
    %1477 = vmatpush1.bf16.msra.mxu0 0
    %1478 = vmatprep.subr.bf16.mxu0 0
    %1479 = vmatpush1.bf16.msra.mxu0 0
    %1480 = vmatprep.subr.bf16.mxu0 0
    %1481 = vmatpush1.bf16.msra.mxu0 0
    %1482 = vmatprep.mubr.bf16.mxu0 0
    %1483 = vmatmul.mubr.bf16.gmra.mrb[0].mxu0 %v1407
    %v1484 = vpop.f32.mrb[0].mxu0
    %v1485 = vadd.f32 0.0, %v1484
    %v1486 = vpop.f32.mrb[0].mxu0
    %v1487 = vadd.f32 0.0, %v1486
    %v1488 = vpop.f32.mrb[0].mxu0
    %v1489 = vpop.f32.mrb[0].mxu0
    %1490 = vdwg.mxu0
    %v1495 = vrot.slane %v1444, 2
    %v1496 = vrot.slane %v1446, 2
    %v1497 = vrot.slane %v1485, 2
    %v1498 = vrot.slane %v1487, 2
    %v1503 = vadd.f32 %v284, %v1495
    %v1504 = vadd.f32 %v286, %v1496
    %v1505 = vadd.f32 %v327, %v1497
    %v1506 = vadd.f32 %v329, %v1498
    %v1507 = vxor.u32 %v1503, 2147483648
    %v1508 = vmul.f32 %v1507, 1.442695
    %v1509 = vpow.pop %v1508
    %v1510 = vadd.f32 %v1509, 1.0
    %v1511 = vrcp.pop %v1510
    %v1512 = vmul.f32 1.0, %v1511
    %v1513 = vxor.u32 %v1504, 2147483648
    %v1514 = vmul.f32 %v1513, 1.442695
    %v1515 = vpow.pop %v1514
    %v1516 = vadd.f32 %v1515, 1.0
    %v1517 = vrcp.pop %v1516
    %v1518 = vmul.f32 1.0, %v1517
    %v1519 = vtanh.pop %v1505
    %v1520 = vxor.u32 %v1506, 2147483648
    %v1521 = vmul.f32 %v1520, 1.442695
    %v1522 = vpow.pop %v1521
    %v1523 = vadd.f32 %v1522, 1.0
    %v1524 = vrcp.pop %v1523
    %v1525 = vmul.f32 1.0, %v1524
    %v1527 = vrot.slane %v1400, 6
    %v1529 = vmul.f32 %v1518, %v1527
    %v1530 = vmul.f32 %v1512, %v1519
    %v1531 = vadd.f32 %v1529, %v1530
    %v1532 = vtanh.pop %v1531
    %v1533 = vmul.f32 %v1525, %v1532
    %s1534 = scalar_lea.vmem [#allocation2], 14
    %1535 = vst [vmem:[%s1534 - $0x6] sm:$0xc0] %v1533
    %1536 = vst [vmem:[%s7 - $0x6] sm:$0xc0] %v1533
    %1537 = vst [vmem:[%s8 - $0x6] sm:$0xc0] %v1531
    // Predicated region
    $region26: #{lstm_encoder_forward.1} parent=1 // pred_check
      _
    $region27: #{lstm_encoder_forward.1} parent=1 // pred_check_branch
      %1539 = sbr.rel (0) target = $region29
    $region28: #{lstm_encoder_forward.1} parent=1 // pred_region
      %s1541 = ssub.s32 256, 256
      %1542 = vsyncadd [#allocation3], %s1541
      %s1543 = sshll.u32 [#allocation2], 4
      %s1544 = int_to_ptr.vmem [resolvable:$true] %s1543
      %1549 = dma.vmem_to_hbm [thread:$0]  %s1544, 256, %s6, [#allocation3], 32, 32, 2
    $region29: #{lstm_encoder_forward.1} parent=1 // pred_fallthru
      _
    // Predicated region
    $region30: #{lstm_encoder_forward.1} parent=1 // pred_check
      _
    $region31: #{lstm_encoder_forward.1} parent=1 // pred_check_branch
      %1551 = sbr.rel (0) target = $region33
    $region32: #{lstm_encoder_forward.1} parent=1 // pred_region
      _
    $region33: #{lstm_encoder_forward.1} parent=1 // pred_fallthru
      _
    // Predicated region
    $region34: #{lstm_encoder_forward.1} parent=1 // pred_check
      _
    $region35: #{lstm_encoder_forward.1} parent=1 // pred_check_branch
      %1553 = sbr.rel (0) target = $region37
    $region36: #{lstm_encoder_forward.1} parent=1 // pred_region
      _
    $region37: #{lstm_encoder_forward.1} parent=1 // pred_fallthru
      _
    // Predicated region
    $region38: #{lstm_encoder_forward.1} parent=1 // pred_check
      _
    $region39: #{lstm_encoder_forward.1} parent=1 // pred_check_branch
      %1555 = sbr.rel (0) target = $region41
    $region40: #{lstm_encoder_forward.1} parent=1 // pred_region
      %1556 = dma.done [#allocation3], 256
    $region41: #{lstm_encoder_forward.1} parent=1 // pred_fallthru
      _
    // Predicated region
    $region42: #{lstm_encoder_forward.1} parent=1 // pred_check
      _
    $region43: #{lstm_encoder_forward.1} parent=1 // pred_check_branch
      %1558 = sbr.rel (0) target = $region45
    $region44: #{lstm_encoder_forward.1} parent=1 // pred_region
      _
    $region45: #{lstm_encoder_forward.1} parent=1 // pred_fallthru
      _
    // Predicated region
    $region46: #{lstm_encoder_forward.1} parent=1 // pred_check
      _
    $region47: #{lstm_encoder_forward.1} parent=1 // pred_check_branch
      %1560 = sbr.rel (0) target = $region49
    $region48: #{lstm_encoder_forward.1} parent=1 // pred_region
      _
    $region49: #{lstm_encoder_forward.1} parent=1 // pred_fallthru
      _
    %1561 = vsyncpa [#allocation3], 1

</llo_original>
